<compile_context>
chip_gen: v5e
topology: v5e:2x2
jax: 0.10.0
libtpu: 0.0.40
codegen_flags: <defaults>
</compile_context>

<pallas_src>
import functools

import numpy as np
import jax
import jax.numpy as jnp
from jax.experimental import pallas as pl
from jax.experimental.pallas import tpu as pltpu

LANE = 128  # lane width: pose-head dims are padded to this for dense loads/stores


def _round_up(x, m):
    return (x + m - 1) // m * m


def _tensorcores_per_device():
    """Best-effort TC count per JAX device (v7x / v4 / v5p expose 2)."""
    try:
        kind = jax.devices()[0].device_kind.lower()
    except Exception:
        return 1
    if "v7" in kind or "v4" in kind or "v5p" in kind:
        return 2
    return 1


def _pick_images_per_step(B, H, W, c_in, c_out, n_tc,
                          vmem_budget_bytes=10 * 1024 * 1024):
    """Images per grid step: largest divisor of B whose per-step working set fits
    the VMEM budget.  On 2-TC parts prefer >= 2 steps per core (so DMA of step
    i+1 hides behind compute of step i); on 1-TC parts prefer one big step
    (per-step fixed overhead dominates at these sizes)."""
    Kp = _round_up((W + 2) * c_in + 1, 16)
    per_image = (2 * (H + 2) * Kp * 2        # bf16 input block, double-buffered
                 + H * W * c_out * 4         # f32 conv accumulator
                 + H * LANE * 4              # f32 pooled/fc1 rows
                 + 2 * LANE * 4)             # f32 output block, double-buffered
    max_ipt = max(1, vmem_budget_bytes // per_image)
    divs = [d for d in range(1, B + 1) if B % d == 0 and d <= max_ipt]
    target_steps = 2 * n_tc if n_tc > 1 else 1
    good = [d for d in divs if B // d >= target_steps]
    return max(good) if good else max(divs)
    # TODO(synk): add a second "arbitrary" row-band grid axis (H tiles + VMEM
    # pooling accumulator) for images too large to fit in a single step.


# ----------------------------------------------------------------------------
# Fused kernel: 3-tap conv matmuls (+bias via ones col) -> ReLU
#               -> pool(W,C)+fc1 as one matmul -> H-sum + b1 -> ReLU -> fc2
# ----------------------------------------------------------------------------
def fused_mapnet_kernel(x_ref, wtap_ref, head_ref, o_ref, *,
                        ipt, H, W, c_out, off_b1, off_w2, off_b2):
    rows = ipt * H
    Kp = x_ref.shape[-1]
    WC = W * c_out

    x = x_ref[...]                                       # (ipt, H+2, Kp) bf16
    # 3x3 conv as 3 shifted matmuls; the 3 dw shifts + conv bias are folded
    # into each block-banded tap weight.  bf16 operands, f32 accumulation.
    acc = None
    for dh in range(3):
        lhs = x[:, dh:dh + H, :].reshape(rows, Kp)
        part = jnp.dot(lhs, wtap_ref[dh], preferred_element_type=jnp.float32)
        acc = part if acc is None else acc + part        # (rows, W*c_out) f32
    acc = jnp.maximum(acc, 0.0)                          # ReLU (bias already in)

    # global-average-pool over (W, channels) + fc1 + 1/(H*W): one MXU matmul
    # (fc1 weight pre-tiled over W and pre-scaled host-side).
    s = jnp.dot(acc, head_ref[:WC, :], preferred_element_type=jnp.float32)
    h1 = jnp.sum(s.reshape(ipt, H, LANE), axis=1)        # remaining H-sum (VPU, small)
    h1 = jnp.maximum(h1 + head_ref[off_b1:off_b1 + 1, :], 0.0)      # (ipt, 128)

    out = jnp.dot(h1, head_ref[off_w2:off_w2 + LANE, :],
                  preferred_element_type=jnp.float32) + head_ref[off_b2:off_b2 + 1, :]
    o_ref[0] = out.astype(o_ref.dtype)                   # lane-dense (ipt, 128) store


# ----------------------------------------------------------------------------
# Host-side parameter packing (one-time) and input prep (per call, pure XLA glue)
# ----------------------------------------------------------------------------
def pack_params(params, H, W, Kp, compute_dtype=jnp.bfloat16):
    wc = np.asarray(params["w_conv"], np.float32)        # (C_out, C_in, 3, 3)
    bc = np.asarray(params["b_conv"], np.float32)        # (C_out,)
    w1 = np.asarray(params["w1"], np.float32)            # (C_out, hid)
    b1 = np.asarray(params["b1"], np.float32)            # (hid,)
    w2 = np.asarray(params["w2"], np.float32)            # (hid, out_dim)
    b2 = np.asarray(params["b2"], np.float32)            # (out_dim,)
    c_out, c_in = wc.shape[0], wc.shape[1]
    hid, out_dim = w2.shape
    assert hid <= LANE and out_dim <= LANE
    WC = W * c_out
    ones_col = (W + 2) * c_in                            # built-in bias column

    # Block-banded tap weights (3, Kp, W*C_out): tap dh maps input column
    # (w+dw)*C_in + ci -> output column w*C_out + co with value wc[co,ci,dh,dw];
    # the three dw shifts occupy disjoint entries so they are summed into one
    # weight per dh.  The conv bias sits on the ones row of tap dh==1 only.
    wtap = np.zeros((3, Kp, WC), np.float32)
    for dh in range(3):
        for dw in range(3):
            blk = wc[:, :, dh, dw].T                     # (C_in, C_out)
            for w in range(W):
                r0 = (w + dw) * c_in
                wtap[dh, r0:r0 + c_in, w * c_out:(w + 1) * c_out] += blk
    wtap[1, ones_col, :] = np.tile(bc, W)

    # f32 head slab (8-row aligned sections, 128 lanes):
    #   [ fc1 weight tiled over W and pre-scaled by 1/(H*W) | b1 | fc2 | b2 ]
    off_b1 = _round_up(WC, 8)
    off_w2 = off_b1 + 8
    off_b2 = off_w2 + LANE
    head = np.zeros((off_b2 + 8, LANE), np.float32)
    head[:WC, :hid] = np.tile(w1 / float(H * W), (W, 1))
    head[off_b1, :hid] = b1
    head[off_w2:off_w2 + hid, :out_dim] = w2
    head[off_b2, :out_dim] = b2

    offs = {"b1": off_b1, "w2": off_w2, "b2": off_b2}
    return (jnp.asarray(wtap, compute_dtype), jnp.asarray(head, jnp.float32),
            offs, c_out, out_dim)


def _prep_input(x_nchw, H, W, Kp, compute_dtype=jnp.bfloat16):
    """NCHW -> zero-padded NHWC with (W+2, C) merged into the lane dim, plus a
    ones column (for the conv bias) and zero padding up to Kp lanes."""
    B, C = x_nchw.shape[0], x_nchw.shape[1]
    x_nhwc = jnp.transpose(x_nchw, (0, 2, 3, 1))
    xp = jnp.pad(x_nhwc, ((0, 0), (1, 1), (1, 1), (0, 0)))
    xf = xp.reshape(B, H + 2, (W + 2) * C)
    slab = jnp.concatenate([xf, jnp.ones((B, H + 2, 1), xf.dtype)], axis=-1)
    slab = jnp.pad(slab, ((0, 0), (0, 0), (0, Kp - slab.shape[-1])))
    return slab.astype(compute_dtype)


def posenet_fused_pallas(x_nchw, params, compute_dtype=jnp.bfloat16):
    """x_nchw: (B, C_in, H, W) -> poses (B, 6), fully fused in one pallas_call."""
    B, C, H, W = x_nchw.shape
    Kp = _round_up((W + 2) * C + 1, 16)

    wtap, head, offs, c_out, out_dim = pack_params(params, H, W, Kp, compute_dtype)
    x_slab = _prep_input(x_nchw, H, W, Kp, compute_dtype)

    n_tc = _tensorcores_per_device()
    ipt = _pick_images_per_step(B, H, W, C, c_out, n_tc)   # images per grid step
    grid = B // ipt

    out_pad = pl.pallas_call(
        functools.partial(fused_mapnet_kernel, ipt=ipt, H=H, W=W, c_out=c_out,
                          off_b1=offs["b1"], off_w2=offs["w2"], off_b2=offs["b2"]),
        out_shape=jax.ShapeDtypeStruct((grid, ipt, LANE), jnp.float32),
        grid_spec=pltpu.PrefetchScalarGridSpec(
            num_scalar_prefetch=0,
            grid=(grid,),
            in_specs=[
                pl.BlockSpec((ipt, H + 2, Kp), lambda i: (i, 0, 0)),   # image band
                pl.BlockSpec(tuple(wtap.shape), lambda i: (0, 0, 0)),  # tap weights (resident)
                pl.BlockSpec(tuple(head.shape), lambda i: (0, 0)),     # f32 head slab (resident)
            ],
            out_specs=pl.BlockSpec((1, ipt, LANE), lambda i: (i, 0, 0)),
        ),
        compiler_params=pltpu.CompilerParams(
            dimension_semantics=("parallel",),
            vmem_limit_bytes=32 * 1024 * 1024,
        ),
    )(x_slab, wtap, head)

    return out_pad.reshape(B, LANE)[:, :out_dim]           # strip lane pad -> (B, 6)


# ----------------------------------------------------------------------------
# MapNet wrapper (mirrors the PyTorch module's forward)
# ----------------------------------------------------------------------------
def mapnet_forward(rgbs, params, depths=None, compute_dtype=jnp.bfloat16):
    """rgbs: (N, T, C, H, W) -> poses (N, T, 6).

    The two_stream/`depths` branch of the PyTorch module is unused here
    (depths=None in the reference forward)."""
    N, T, C, H, W = rgbs.shape
    x = rgbs.reshape(N * T, C, H, W)                  # fold time into batch
    poses = posenet_fused_pallas(x, params, compute_dtype)   # (N*T, 6)
    return poses.reshape(N, T, -1)                    # unfold -> (N, T, 6)


def make_params(key, c_in=4, c_feat=32, hidden=64):
    ks = jax.random.split(key, 6)
    scale = 0.1
    return {
        "w_conv": scale * jax.random.normal(ks[0], (c_feat, c_in, 3, 3), jnp.float32),
        "b_conv": scale * jax.random.normal(ks[1], (c_feat,), jnp.float32),
        "w1": scale * jax.random.normal(ks[2], (c_feat, hidden), jnp.float32),
        "b1": scale * jax.random.normal(ks[3], (hidden,), jnp.float32),
        "w2": scale * jax.random.normal(ks[4], (hidden, 6), jnp.float32),
        "b2": scale * jax.random.normal(ks[5], (6,), jnp.float32),
    }


# Pure-JAX f32 reference for verification
def mapnet_reference(rgbs, params):
    N, T, C, H, W = rgbs.shape
    x = rgbs.reshape(N * T, C, H, W)
    y = jax.lax.conv_general_dilated(
        x, params["w_conv"], window_strides=(1, 1), padding="SAME",
        dimension_numbers=("NCHW", "OIHW", "NCHW"))
    y = jnp.maximum(y + params["b_conv"][None, :, None, None], 0.0)
    feat = jnp.mean(y, axis=(2, 3))
    h = jnp.maximum(feat @ params["w1"] + params["b1"], 0.0)
    poses = h @ params["w2"] + params["b2"]
    return poses.reshape(N, T, -1)


if __name__ == "__main__":
    key = jax.random.PRNGKey(0)
    k_in, k_p = jax.random.split(key)

    N, T, C, H, W = 2, 8, 4, 16, 16
    rgbs = jax.random.normal(k_in, (N, T, C, H, W), jnp.float32)
    params = make_params(k_p, c_in=C, c_feat=32, hidden=64)

    poses = jax.block_until_ready(mapnet_forward(rgbs, params))
    ref = jax.block_until_ready(mapnet_reference(rgbs, params))

    assert poses.shape == (N, T, 6), poses.shape
    # bf16 conv operands with f32 accumulation: tolerance relaxed vs pure-f32.
    np.testing.assert_allclose(np.asarray(poses), np.asarray(ref),
                               rtol=1e-2, atol=1e-2)
    print("KERNEL_OK")
</pallas_src>

<mosaic_0001>
module attributes {stable_mosaic.version = 11 : i64} {
  func.func @fused_mapnet_kernel(%arg0: i32, %arg1: memref<16x18x80xbf16, #tpu.memory_space<vmem>>, %arg2: memref<3x80x512xbf16, #tpu.memory_space<vmem>>, %arg3: memref<656x128xf32, #tpu.memory_space<vmem>>, %arg4: memref<1x16x128xf32, #tpu.memory_space<vmem>>) attributes {dimension_semantics = [#tpu.dimension_semantics<parallel>], iteration_bounds = array<i64: 1>, scalar_prefetch = 0 : i64, scratch_operands = 0 : i64, tpu.core_type = #tpu.core_type<tc>, window_params = [{transform_indices = @transform_0, window_bounds = array<i64: 16, 18, 80>}, {pipeline_mode = #tpu.pipeline_mode<synchronous>, transform_indices = @transform_1, window_bounds = array<i64: 3, 80, 512>}, {pipeline_mode = #tpu.pipeline_mode<synchronous>, transform_indices = @transform_2, window_bounds = array<i64: 656, 128>}, {transform_indices = @transform_3, window_bounds = array<i64: 1, 16, 128>}]} {
    %c0 = arith.constant 0 : index
    %c0_0 = arith.constant 0 : index
    %c0_1 = arith.constant 0 : index
    %0 = vector.load %arg1[%c0, %c0_0, %c0_1] : memref<16x18x80xbf16, #tpu.memory_space<vmem>>, vector<16x18x80xbf16>
    %1 = vector.extract_strided_slice %0 {offsets = [0, 0, 0], sizes = [16, 16, 80], strides = [1, 1, 1]} : vector<16x18x80xbf16> to vector<16x16x80xbf16>
    %2 = vector.shape_cast %1 : vector<16x16x80xbf16> to vector<256x80xbf16>
    %c0_2 = arith.constant 0 : index
    %c0_3 = arith.constant 0 : index
    %c0_4 = arith.constant 0 : index
    %3 = vector.load %arg2[%c0_2, %c0_3, %c0_4] : memref<3x80x512xbf16, #tpu.memory_space<vmem>>, vector<1x80x512xbf16>
    %4 = vector.shape_cast %3 : vector<1x80x512xbf16> to vector<80x512xbf16>
    %cst = arith.constant dense<0.000000e+00> : vector<256x512xf32>
    %5 = tpu.matmul %2, %4, %cst {dimension_numbers = #tpu.dot_dimension_numbers<[1], [0], [0], [1], [0, 0, 1, 1], [], []>} : vector<256x80xbf16>, vector<80x512xbf16>, vector<256x512xf32> -> vector<256x512xf32>
    %6 = vector.extract_strided_slice %0 {offsets = [0, 1, 0], sizes = [16, 16, 80], strides = [1, 1, 1]} : vector<16x18x80xbf16> to vector<16x16x80xbf16>
    %7 = vector.shape_cast %6 : vector<16x16x80xbf16> to vector<256x80xbf16>
    %c1 = arith.constant 1 : index
    %c0_5 = arith.constant 0 : index
    %c0_6 = arith.constant 0 : index
    %8 = vector.load %arg2[%c1, %c0_5, %c0_6] : memref<3x80x512xbf16, #tpu.memory_space<vmem>>, vector<1x80x512xbf16>
    %9 = vector.shape_cast %8 : vector<1x80x512xbf16> to vector<80x512xbf16>
    %cst_7 = arith.constant dense<0.000000e+00> : vector<256x512xf32>
    %10 = tpu.matmul %7, %9, %cst_7 {dimension_numbers = #tpu.dot_dimension_numbers<[1], [0], [0], [1], [0, 0, 1, 1], [], []>} : vector<256x80xbf16>, vector<80x512xbf16>, vector<256x512xf32> -> vector<256x512xf32>
    %11 = arith.addf %5, %10 : vector<256x512xf32>
    %12 = vector.extract_strided_slice %0 {offsets = [0, 2, 0], sizes = [16, 16, 80], strides = [1, 1, 1]} : vector<16x18x80xbf16> to vector<16x16x80xbf16>
    %13 = vector.shape_cast %12 : vector<16x16x80xbf16> to vector<256x80xbf16>
    %c2 = arith.constant 2 : index
    %c0_8 = arith.constant 0 : index
    %c0_9 = arith.constant 0 : index
    %14 = vector.load %arg2[%c2, %c0_8, %c0_9] : memref<3x80x512xbf16, #tpu.memory_space<vmem>>, vector<1x80x512xbf16>
    %15 = vector.shape_cast %14 : vector<1x80x512xbf16> to vector<80x512xbf16>
    %cst_10 = arith.constant dense<0.000000e+00> : vector<256x512xf32>
    %16 = tpu.matmul %13, %15, %cst_10 {dimension_numbers = #tpu.dot_dimension_numbers<[1], [0], [0], [1], [0, 0, 1, 1], [], []>} : vector<256x80xbf16>, vector<80x512xbf16>, vector<256x512xf32> -> vector<256x512xf32>
    %17 = arith.addf %11, %16 : vector<256x512xf32>
    %cst_11 = arith.constant 0.000000e+00 : f32
    %18 = vector.broadcast %cst_11 : f32 to vector<256x512xf32>
    %19 = arith.maximumf %17, %18 : vector<256x512xf32>
    %c0_12 = arith.constant 0 : index
    %c0_13 = arith.constant 0 : index
    %20 = vector.load %arg3[%c0_12, %c0_13] : memref<656x128xf32, #tpu.memory_space<vmem>>, vector<512x128xf32>
    %cst_14 = arith.constant dense<0.000000e+00> : vector<256x128xf32>
    %21 = tpu.matmul %19, %20, %cst_14 {dimension_numbers = #tpu.dot_dimension_numbers<[1], [0], [0], [1], [0, 0, 1, 1], [], []>} : vector<256x512xf32>, vector<512x128xf32>, vector<256x128xf32> -> vector<256x128xf32>
    %22 = vector.shape_cast %21 : vector<256x128xf32> to vector<16x16x128xf32>
    %cst_15 = arith.constant dense<0.000000e+00> : vector<16x128xf32>
    %23 = vector.multi_reduction <add>, %22, %cst_15 [1] : vector<16x16x128xf32> to vector<16x128xf32>
    %c512 = arith.constant 512 : index
    %c0_16 = arith.constant 0 : index
    %24 = vector.load %arg3[%c512, %c0_16] : memref<656x128xf32, #tpu.memory_space<vmem>>, vector<1x128xf32>
    %25 = vector.broadcast %24 : vector<1x128xf32> to vector<16x128xf32>
    %26 = arith.addf %23, %25 : vector<16x128xf32>
    %cst_17 = arith.constant 0.000000e+00 : f32
    %27 = vector.broadcast %cst_17 : f32 to vector<16x128xf32>
    %28 = arith.maximumf %26, %27 : vector<16x128xf32>
    %c520 = arith.constant 520 : index
    %c0_18 = arith.constant 0 : index
    %29 = vector.load %arg3[%c520, %c0_18] : memref<656x128xf32, #tpu.memory_space<vmem>>, vector<128x128xf32>
    %cst_19 = arith.constant dense<0.000000e+00> : vector<16x128xf32>
    %30 = tpu.matmul %28, %29, %cst_19 {dimension_numbers = #tpu.dot_dimension_numbers<[1], [0], [0], [1], [0, 0, 1, 1], [], []>} : vector<16x128xf32>, vector<128x128xf32>, vector<16x128xf32> -> vector<16x128xf32>
    %c648 = arith.constant 648 : index
    %c0_20 = arith.constant 0 : index
    %31 = vector.load %arg3[%c648, %c0_20] : memref<656x128xf32, #tpu.memory_space<vmem>>, vector<1x128xf32>
    %32 = vector.broadcast %31 : vector<1x128xf32> to vector<16x128xf32>
    %33 = arith.addf %30, %32 : vector<16x128xf32>
    %c0_21 = arith.constant 0 : index
    %c0_22 = arith.constant 0 : index
    %c0_23 = arith.constant 0 : index
    %34 = vector.load %arg4[%c0_21, %c0_22, %c0_23] : memref<1x16x128xf32, #tpu.memory_space<vmem>>, vector<1x16x128xf32>
    %35 = vector.shape_cast %34 : vector<1x16x128xf32> to vector<16x128xf32>
    %36 = vector.shape_cast %33 : vector<16x128xf32> to vector<1x16x128xf32>
    tpu.vector_store %arg4[%c0_21, %c0_22, %c0_23], %36 {strides = array<i32>} : memref<1x16x128xf32, #tpu.memory_space<vmem>>, vector<1x16x128xf32>,
    return
  }
  func.func @transform_0(%arg0: i32) -> (i32, i32, i32) {
    %c0_i32 = arith.constant 0 : i32
    %c0_i32_0 = arith.constant 0 : i32
    %c0_i32_1 = arith.constant 0 : i32
    return %arg0, %c0_i32, %c0_i32_0 : i32, i32, i32
  }
  func.func @transform_1(%arg0: i32) -> (i32, i32, i32) {
    %c0_i32 = arith.constant 0 : i32
    %c0_i32_0 = arith.constant 0 : i32
    %c0_i32_1 = arith.constant 0 : i32
    %c0_i32_2 = arith.constant 0 : i32
    return %c0_i32, %c0_i32_0, %c0_i32_1 : i32, i32, i32
  }
  func.func @transform_2(%arg0: i32) -> (i32, i32) {
    %c0_i32 = arith.constant 0 : i32
    %c0_i32_0 = arith.constant 0 : i32
    %c0_i32_1 = arith.constant 0 : i32
    return %c0_i32, %c0_i32_0 : i32, i32
  }
  func.func @transform_3(%arg0: i32) -> (i32, i32, i32) {
    %c0_i32 = arith.constant 0 : i32
    %c0_i32_0 = arith.constant 0 : i32
    %c0_i32_1 = arith.constant 0 : i32
    return %arg0, %c0_i32, %c0_i32_0 : i32, i32, i32
  }
}

</mosaic_0001>

<llo_original>
// kernel: tpu_custom_call.1
$region0: #{tpu_custom_call.1}
  #allocation0 [shape = 'u32[]', space=smem, size = 0x4, offset = 0x4, fixed_abs, tag = 'smem constant byte address 0x4 - core index']
  #allocation1 [shape = 'u32[72,128]{1,0:T(1,128)}', space=vmem, size = 0x9000, scoped, tag = 'internal scratch']
  %s0 = inlined_call_operand.vmem [shape: bf16[16,18,80], index: 0, kind: input, shape index: {}]
  %s1 = inlined_call_operand.hbm [shape: bf16[3,80,512], index: 1, kind: input, shape index: {}]
  %s2 = inlined_call_operand.hbm [shape: f32[656,128], index: 2, kind: input, shape index: {}]
  %s3 = inlined_call_operand.hbm [shape: f32[1,16,128], index: 3, kind: output, shape index: {}]
  %s4 = sld [smem:[#allocation0]]
  $region30: #{tpu_custom_call.1} parent=0
    _
  %s6 = ssub.s32 1, %s4
  %s7 = scalar_select 0, %s6, %s4
  $region1: #{tpu_custom_call.1} parent=0
    #allocation2 [shape = 'u8[245760]{0}', space=vmem, size = 0x3c000, scoped, tag = 'input window, operand 1, single buffered']
    #allocation3 [shape = 's32[1]{0}', space=sflag, size = 0x4, scoped, tag = 'scoped memory for tpu_custom_call.1']
    #allocation4 [shape = 's32[1]{0}', space=sflag, size = 0x4, scoped, tag = 'scoped memory for tpu_custom_call.1']
    #allocation5 [shape = 'u8[335872]{0}', space=vmem, size = 0x52000, scoped, tag = 'input window, operand 2, single buffered']
    #allocation6 [shape = 's32[1]{0}', space=sflag, size = 0x4, scoped, tag = 'scoped memory for tpu_custom_call.1']
    #allocation7 [shape = 'u8[8192]{0}', space=vmem, size = 0x2000, scoped, tag = 'output window, operand 0, single buffered']
    %8 = vsyncpa [#allocation3], 0
    %9 = vsyncpa [#allocation6], 0
    %10 = vsyncpa [#allocation4], 0
    // Predicated region
    $region2: #{tpu_custom_call.1} parent=1 // pred_check
      _
    $region3: #{tpu_custom_call.1} parent=1 // pred_check_branch
      %12 = sbr.rel (0) target = $region5
    $region4: #{tpu_custom_call.1} parent=1 // pred_region
      _
    $region5: #{tpu_custom_call.1} parent=1 // pred_fallthru
      _
    // Predicated region
    $region6: #{tpu_custom_call.1} parent=1 // pred_check
      _
    $region7: #{tpu_custom_call.1} parent=1 // pred_check_branch
      %14 = sbr.rel (0) target = $region9
    $region8: #{tpu_custom_call.1} parent=1 // pred_region
      %16 = vsyncadd [#allocation3], 0
      %s17 = sshll.u32 %s1, 4
      %s18 = int_to_ptr.hbm [resolvable:$true] %s17
      %s19 = sshll.u32 [#allocation2], 4
      %s20 = int_to_ptr.vmem [resolvable:$true] %s19
      %25 = dma.hbm_to_vmem [thread:$0]  %s18, 7680, %s20, [#allocation3], 256, 256, 16
    $region9: #{tpu_custom_call.1} parent=1 // pred_fallthru
      _
    // Predicated region
    $region10: #{tpu_custom_call.1} parent=1 // pred_check
      _
    $region11: #{tpu_custom_call.1} parent=1 // pred_check_branch
      %27 = sbr.rel (0) target = $region13
    $region12: #{tpu_custom_call.1} parent=1 // pred_region
      %29 = vsyncadd [#allocation6], 0
      %s30 = sshll.u32 %s2, 4
      %s31 = int_to_ptr.hbm [resolvable:$true] %s30
      %s32 = sshll.u32 [#allocation5], 4
      %s33 = int_to_ptr.vmem [resolvable:$true] %s32
      %38 = dma.hbm_to_vmem [thread:$0]  %s31, 10496, %s33, [#allocation6], 128, 128, 8
    $region13: #{tpu_custom_call.1} parent=1 // pred_fallthru
      _
    // Predicated region
    $region14: #{tpu_custom_call.1} parent=1 // pred_check
      _
    $region15: #{tpu_custom_call.1} parent=1 // pred_check_branch
      %40 = sbr.rel (0) target = $region17
    $region16: #{tpu_custom_call.1} parent=1 // pred_region
      %42 = dma.done [#allocation3], 7680
    $region17: #{tpu_custom_call.1} parent=1 // pred_fallthru
      _
    // Predicated region
    $region18: #{tpu_custom_call.1} parent=1 // pred_check
      _
    $region19: #{tpu_custom_call.1} parent=1 // pred_check_branch
      %44 = sbr.rel (0) target = $region21
    $region20: #{tpu_custom_call.1} parent=1 // pred_region
      %46 = dma.done [#allocation6], 10496
    $region21: #{tpu_custom_call.1} parent=1 // pred_fallthru
      _
    %v48 = vld [vmem:[%s0] sm:$0xf]
    %v49 = vld [vmem:[%s0 + $0x4] sm:$0xf]
    %v50 = vld [vmem:[%s0 + $0x8] sm:$0x1]
    %v51 = vld [vmem:[%s0 + $0xc] sm:$0xf]
    %v52 = vld [vmem:[%s0 + $0x10] sm:$0xf]
    %v53 = vld [vmem:[%s0 + $0x14] sm:$0x1]
    %v54 = vld [vmem:[%s0 + $0x18] sm:$0xf]
    %v55 = vld [vmem:[%s0 + $0x1c] sm:$0xf]
    %v56 = vld [vmem:[%s0 + $0x20] sm:$0x1]
    %v57 = vld [vmem:[%s0 + $0x24] sm:$0xf]
    %v58 = vld [vmem:[%s0 + $0x28] sm:$0xf]
    %v59 = vld [vmem:[%s0 + $0x2c] sm:$0x1]
    %v60 = vld [vmem:[%s0 + $0x30] sm:$0xf]
    %v61 = vld [vmem:[%s0 + $0x34] sm:$0xf]
    %v62 = vld [vmem:[%s0 + $0x38] sm:$0x1]
    %v63 = vld [vmem:[%s0 + $0x3c] sm:$0xf]
    %v64 = vld [vmem:[%s0 + $0x40] sm:$0xf]
    %v65 = vld [vmem:[%s0 + $0x44] sm:$0x1]
    %v66 = vld [vmem:[%s0 + $0x48] sm:$0xf]
    %v67 = vld [vmem:[%s0 + $0x4c] sm:$0xf]
    %v68 = vld [vmem:[%s0 + $0x50] sm:$0x1]
    %v69 = vld [vmem:[%s0 + $0x54] sm:$0xf]
    %v70 = vld [vmem:[%s0 + $0x58] sm:$0xf]
    %v71 = vld [vmem:[%s0 + $0x5c] sm:$0x1]
    %v72 = vld [vmem:[%s0 + $0x60] sm:$0xf]
    %v73 = vld [vmem:[%s0 + $0x64] sm:$0xf]
    %v74 = vld [vmem:[%s0 + $0x68] sm:$0x1]
    %v75 = vld [vmem:[%s0 + $0x6c] sm:$0xf]
    %v76 = vld [vmem:[%s0 + $0x70] sm:$0xf]
    %v77 = vld [vmem:[%s0 + $0x74] sm:$0x1]
    %v78 = vld [vmem:[%s0 + $0x78] sm:$0xf]
    %v79 = vld [vmem:[%s0 + $0x7c] sm:$0xf]
    %v80 = vld [vmem:[%s0 + $0x80] sm:$0x1]
    %v81 = vld [vmem:[%s0 + $0x84] sm:$0xf]
    %v82 = vld [vmem:[%s0 + $0x88] sm:$0xf]
    %v83 = vld [vmem:[%s0 + $0x8c] sm:$0x1]
    %v84 = vld [vmem:[%s0 + $0x90] sm:$0xf]
    %v85 = vld [vmem:[%s0 + $0x94] sm:$0xf]
    %v86 = vld [vmem:[%s0 + $0x98] sm:$0x1]
    %v87 = vld [vmem:[%s0 + $0x9c] sm:$0xf]
    %v88 = vld [vmem:[%s0 + $0xa0] sm:$0xf]
    %v89 = vld [vmem:[%s0 + $0xa4] sm:$0x1]
    %v90 = vld [vmem:[%s0 + $0xa8] sm:$0xf]
    %v91 = vld [vmem:[%s0 + $0xac] sm:$0xf]
    %v92 = vld [vmem:[%s0 + $0xb0] sm:$0x1]
    %v93 = vld [vmem:[%s0 + $0xb4] sm:$0xf]
    %v94 = vld [vmem:[%s0 + $0xb8] sm:$0xf]
    %v95 = vld [vmem:[%s0 + $0xbc] sm:$0x1]
    %v96 = vld [vmem:[#allocation2] sm:$0xff]
    %v97 = vld [vmem:[#allocation2 + $0x8] sm:$0xff]
    %v98 = vld [vmem:[#allocation2 + $0x10] sm:$0xff]
    %v99 = vld [vmem:[#allocation2 + $0x18] sm:$0xff]
    %v100 = vld [vmem:[#allocation2 + $0x20] sm:$0xff]
    %v101 = vld [vmem:[#allocation2 + $0x28] sm:$0xff]
    %v102 = vld [vmem:[#allocation2 + $0x30] sm:$0xff]
    %v103 = vld [vmem:[#allocation2 + $0x38] sm:$0xff]
    %v104 = vld [vmem:[#allocation2 + $0x40] sm:$0xff]
    %v105 = vld [vmem:[#allocation2 + $0x48] sm:$0xff]
    %v106 = vld [vmem:[#allocation2 + $0x50] sm:$0xff]
    %v107 = vld [vmem:[#allocation2 + $0x58] sm:$0xff]
    %v108 = vld [vmem:[#allocation2 + $0x60] sm:$0xff]
    %v109 = vld [vmem:[#allocation2 + $0x68] sm:$0xff]
    %v110 = vld [vmem:[#allocation2 + $0x70] sm:$0xff]
    %v111 = vld [vmem:[#allocation2 + $0x78] sm:$0xff]
    %v112 = vld [vmem:[#allocation2 + $0x80] sm:$0xff]
    %v113 = vld [vmem:[#allocation2 + $0x88] sm:$0xff]
    %v114 = vld [vmem:[#allocation2 + $0x90] sm:$0xff]
    %v115 = vld [vmem:[#allocation2 + $0x98] sm:$0xff]
    %vm116 = vsmask.f32 3328
    %vm117 = vsmask.f32 7440
    %vm118 = vmor %vm116, %vm117
    %v120 = vshrl.u32 %v48, 16
    %v122 = vrot.slane %v120, 4
    %v123 = vshll.u32 %v48, 16
    %v125 = vrot.slane %v123, 5
    %v126 = vor.u32 %v122, %v125
    %v127 = vrot.slane %v126, 4
    %v129 = vshll.u32 %v49, 16
    %v131 = vrot.slane %v129, 5
    %v132 = vsel %vm118, %v127, %v131
    %v133 = vshrl.u32 %v49, 16
    %v135 = vrot.slane %v133, 4
    %v136 = vor.u32 %v135, %v131
    %v137 = vrot.slane %v136, 4
    %v139 = vshll.u32 %v50, 16
    %v141 = vrot.slane %v139, 5
    %v142 = vsel %vm118, %v137, %v141
    %v144 = vshrl.u32 %v51, 16
    %v146 = vrot.slane %v144, 4
    %v147 = vshll.u32 %v51, 16
    %v149 = vrot.slane %v147, 5
    %v150 = vor.u32 %v146, %v149
    %v151 = vrot.slane %v150, 4
    %v153 = vshll.u32 %v52, 16
    %v155 = vrot.slane %v153, 5
    %v156 = vsel %vm118, %v151, %v155
    %v157 = vshrl.u32 %v52, 16
    %v159 = vrot.slane %v157, 4
    %v160 = vor.u32 %v159, %v155
    %v161 = vrot.slane %v160, 4
    %v163 = vshll.u32 %v53, 16
    %v165 = vrot.slane %v163, 5
    %v166 = vsel %vm118, %v161, %v165
    %v168 = vshrl.u32 %v54, 16
    %v170 = vrot.slane %v168, 4
    %v171 = vshll.u32 %v54, 16
    %v173 = vrot.slane %v171, 5
    %v174 = vor.u32 %v170, %v173
    %v175 = vrot.slane %v174, 4
    %v177 = vshll.u32 %v55, 16
    %v179 = vrot.slane %v177, 5
    %v180 = vsel %vm118, %v175, %v179
    %v181 = vshrl.u32 %v55, 16
    %v183 = vrot.slane %v181, 4
    %v184 = vor.u32 %v183, %v179
    %v185 = vrot.slane %v184, 4
    %v187 = vshll.u32 %v56, 16
    %v189 = vrot.slane %v187, 5
    %v190 = vsel %vm118, %v185, %v189
    %v192 = vshrl.u32 %v57, 16
    %v194 = vrot.slane %v192, 4
    %v195 = vshll.u32 %v57, 16
    %v197 = vrot.slane %v195, 5
    %v198 = vor.u32 %v194, %v197
    %v199 = vrot.slane %v198, 4
    %v201 = vshll.u32 %v58, 16
    %v203 = vrot.slane %v201, 5
    %v204 = vsel %vm118, %v199, %v203
    %v205 = vshrl.u32 %v58, 16
    %v207 = vrot.slane %v205, 4
    %v208 = vor.u32 %v207, %v203
    %v209 = vrot.slane %v208, 4
    %v211 = vshll.u32 %v59, 16
    %v213 = vrot.slane %v211, 5
    %v214 = vsel %vm118, %v209, %v213
    %v216 = vshrl.u32 %v60, 16
    %v218 = vrot.slane %v216, 4
    %v219 = vshll.u32 %v60, 16
    %v221 = vrot.slane %v219, 5
    %v222 = vor.u32 %v218, %v221
    %v223 = vrot.slane %v222, 4
    %v225 = vshll.u32 %v61, 16
    %v227 = vrot.slane %v225, 5
    %v228 = vsel %vm118, %v223, %v227
    %v229 = vshrl.u32 %v61, 16
    %v231 = vrot.slane %v229, 4
    %v232 = vor.u32 %v231, %v227
    %v233 = vrot.slane %v232, 4
    %v235 = vshll.u32 %v62, 16
    %v237 = vrot.slane %v235, 5
    %v238 = vsel %vm118, %v233, %v237
    %v240 = vshrl.u32 %v63, 16
    %v242 = vrot.slane %v240, 4
    %v243 = vshll.u32 %v63, 16
    %v245 = vrot.slane %v243, 5
    %v246 = vor.u32 %v242, %v245
    %v247 = vrot.slane %v246, 4
    %v249 = vshll.u32 %v64, 16
    %v251 = vrot.slane %v249, 5
    %v252 = vsel %vm118, %v247, %v251
    %v253 = vshrl.u32 %v64, 16
    %v255 = vrot.slane %v253, 4
    %v256 = vor.u32 %v255, %v251
    %v257 = vrot.slane %v256, 4
    %v259 = vshll.u32 %v65, 16
    %v261 = vrot.slane %v259, 5
    %v262 = vsel %vm118, %v257, %v261
    %v264 = vshrl.u32 %v66, 16
    %v266 = vrot.slane %v264, 4
    %v267 = vshll.u32 %v66, 16
    %v269 = vrot.slane %v267, 5
    %v270 = vor.u32 %v266, %v269
    %v271 = vrot.slane %v270, 4
    %v273 = vshll.u32 %v67, 16
    %v275 = vrot.slane %v273, 5
    %v276 = vsel %vm118, %v271, %v275
    %v277 = vshrl.u32 %v67, 16
    %v279 = vrot.slane %v277, 4
    %v280 = vor.u32 %v279, %v275
    %v281 = vrot.slane %v280, 4
    %v283 = vshll.u32 %v68, 16
    %v285 = vrot.slane %v283, 5
    %v286 = vsel %vm118, %v281, %v285
    %v288 = vshrl.u32 %v69, 16
    %v290 = vrot.slane %v288, 4
    %v291 = vshll.u32 %v69, 16
    %v293 = vrot.slane %v291, 5
    %v294 = vor.u32 %v290, %v293
    %v295 = vrot.slane %v294, 4
    %v297 = vshll.u32 %v70, 16
    %v299 = vrot.slane %v297, 5
    %v300 = vsel %vm118, %v295, %v299
    %v301 = vshrl.u32 %v70, 16
    %v303 = vrot.slane %v301, 4
    %v304 = vor.u32 %v303, %v299
    %v305 = vrot.slane %v304, 4
    %v307 = vshll.u32 %v71, 16
    %v309 = vrot.slane %v307, 5
    %v310 = vsel %vm118, %v305, %v309
    %v312 = vshrl.u32 %v72, 16
    %v314 = vrot.slane %v312, 4
    %v315 = vshll.u32 %v72, 16
    %v317 = vrot.slane %v315, 5
    %v318 = vor.u32 %v314, %v317
    %v319 = vrot.slane %v318, 4
    %v321 = vshll.u32 %v73, 16
    %v323 = vrot.slane %v321, 5
    %v324 = vsel %vm118, %v319, %v323
    %v325 = vshrl.u32 %v73, 16
    %v327 = vrot.slane %v325, 4
    %v328 = vor.u32 %v327, %v323
    %v329 = vrot.slane %v328, 4
    %v331 = vshll.u32 %v74, 16
    %v333 = vrot.slane %v331, 5
    %v334 = vsel %vm118, %v329, %v333
    %v336 = vshrl.u32 %v75, 16
    %v338 = vrot.slane %v336, 4
    %v339 = vshll.u32 %v75, 16
    %v341 = vrot.slane %v339, 5
    %v342 = vor.u32 %v338, %v341
    %v343 = vrot.slane %v342, 4
    %v345 = vshll.u32 %v76, 16
    %v347 = vrot.slane %v345, 5
    %v348 = vsel %vm118, %v343, %v347
    %v349 = vshrl.u32 %v76, 16
    %v351 = vrot.slane %v349, 4
    %v352 = vor.u32 %v351, %v347
    %v353 = vrot.slane %v352, 4
    %v355 = vshll.u32 %v77, 16
    %v357 = vrot.slane %v355, 5
    %v358 = vsel %vm118, %v353, %v357
    %v360 = vshrl.u32 %v78, 16
    %v362 = vrot.slane %v360, 4
    %v363 = vshll.u32 %v78, 16
    %v365 = vrot.slane %v363, 5
    %v366 = vor.u32 %v362, %v365
    %v367 = vrot.slane %v366, 4
    %v369 = vshll.u32 %v79, 16
    %v371 = vrot.slane %v369, 5
    %v372 = vsel %vm118, %v367, %v371
    %v373 = vshrl.u32 %v79, 16
    %v375 = vrot.slane %v373, 4
    %v376 = vor.u32 %v375, %v371
    %v377 = vrot.slane %v376, 4
    %v379 = vshll.u32 %v80, 16
    %v381 = vrot.slane %v379, 5
    %v382 = vsel %vm118, %v377, %v381
    %v384 = vshrl.u32 %v81, 16
    %v386 = vrot.slane %v384, 4
    %v387 = vshll.u32 %v81, 16
    %v389 = vrot.slane %v387, 5
    %v390 = vor.u32 %v386, %v389
    %v391 = vrot.slane %v390, 4
    %v393 = vshll.u32 %v82, 16
    %v395 = vrot.slane %v393, 5
    %v396 = vsel %vm118, %v391, %v395
    %v397 = vshrl.u32 %v82, 16
    %v399 = vrot.slane %v397, 4
    %v400 = vor.u32 %v399, %v395
    %v401 = vrot.slane %v400, 4
    %v403 = vshll.u32 %v83, 16
    %v405 = vrot.slane %v403, 5
    %v406 = vsel %vm118, %v401, %v405
    %v408 = vshrl.u32 %v84, 16
    %v410 = vrot.slane %v408, 4
    %v411 = vshll.u32 %v84, 16
    %v413 = vrot.slane %v411, 5
    %v414 = vor.u32 %v410, %v413
    %v415 = vrot.slane %v414, 4
    %v417 = vshll.u32 %v85, 16
    %v419 = vrot.slane %v417, 5
    %v420 = vsel %vm118, %v415, %v419
    %v421 = vshrl.u32 %v85, 16
    %v423 = vrot.slane %v421, 4
    %v424 = vor.u32 %v423, %v419
    %v425 = vrot.slane %v424, 4
    %v427 = vshll.u32 %v86, 16
    %v429 = vrot.slane %v427, 5
    %v430 = vsel %vm118, %v425, %v429
    %v432 = vshrl.u32 %v87, 16
    %v434 = vrot.slane %v432, 4
    %v435 = vshll.u32 %v87, 16
    %v437 = vrot.slane %v435, 5
    %v438 = vor.u32 %v434, %v437
    %v439 = vrot.slane %v438, 4
    %v441 = vshll.u32 %v88, 16
    %v443 = vrot.slane %v441, 5
    %v444 = vsel %vm118, %v439, %v443
    %v445 = vshrl.u32 %v88, 16
    %v447 = vrot.slane %v445, 4
    %v448 = vor.u32 %v447, %v443
    %v449 = vrot.slane %v448, 4
    %v451 = vshll.u32 %v89, 16
    %v453 = vrot.slane %v451, 5
    %v454 = vsel %vm118, %v449, %v453
    %v456 = vshrl.u32 %v90, 16
    %v458 = vrot.slane %v456, 4
    %v459 = vshll.u32 %v90, 16
    %v461 = vrot.slane %v459, 5
    %v462 = vor.u32 %v458, %v461
    %v463 = vrot.slane %v462, 4
    %v465 = vshll.u32 %v91, 16
    %v467 = vrot.slane %v465, 5
    %v468 = vsel %vm118, %v463, %v467
    %v469 = vshrl.u32 %v91, 16
    %v471 = vrot.slane %v469, 4
    %v472 = vor.u32 %v471, %v467
    %v473 = vrot.slane %v472, 4
    %v475 = vshll.u32 %v92, 16
    %v477 = vrot.slane %v475, 5
    %v478 = vsel %vm118, %v473, %v477
    %v480 = vshrl.u32 %v93, 16
    %v482 = vrot.slane %v480, 4
    %v483 = vshll.u32 %v93, 16
    %v485 = vrot.slane %v483, 5
    %v486 = vor.u32 %v482, %v485
    %v487 = vrot.slane %v486, 4
    %v489 = vshll.u32 %v94, 16
    %v491 = vrot.slane %v489, 5
    %v492 = vsel %vm118, %v487, %v491
    %v493 = vshrl.u32 %v94, 16
    %v495 = vrot.slane %v493, 4
    %v496 = vor.u32 %v495, %v491
    %v497 = vrot.slane %v496, 4
    %v499 = vshll.u32 %v95, 16
    %v501 = vrot.slane %v499, 5
    %v502 = vsel %vm118, %v497, %v501
    %s503 = scalar_lea.vmem [#allocation2], 160
    %v504 = vld [vmem:[%s503] sm:$0xff]
    %v505 = vld [vmem:[%s503 + $0x8] sm:$0xff]
    %v506 = vld [vmem:[%s503 + $0x10] sm:$0xff]
    %v507 = vld [vmem:[%s503 + $0x18] sm:$0xff]
    %v508 = vld [vmem:[%s503 + $0x20] sm:$0xff]
    %v509 = vld [vmem:[%s503 + $0x28] sm:$0xff]
    %v510 = vld [vmem:[%s503 + $0x30] sm:$0xff]
    %v511 = vld [vmem:[%s503 + $0x38] sm:$0xff]
    %v512 = vld [vmem:[%s503 + $0x40] sm:$0xff]
    %v513 = vld [vmem:[%s503 + $0x48] sm:$0xff]
    %v514 = vld [vmem:[%s503 + $0x50] sm:$0xff]
    %v515 = vld [vmem:[%s503 + $0x58] sm:$0xff]
    %v516 = vld [vmem:[%s503 + $0x60] sm:$0xff]
    %v517 = vld [vmem:[%s503 + $0x68] sm:$0xff]
    %v518 = vld [vmem:[%s503 + $0x70] sm:$0xff]
    %v519 = vld [vmem:[%s503 + $0x78] sm:$0xff]
    %v520 = vld [vmem:[%s503 + $0x80] sm:$0xff]
    %v521 = vld [vmem:[%s503 + $0x88] sm:$0xff]
    %v522 = vld [vmem:[%s503 + $0x90] sm:$0xff]
    %v523 = vld [vmem:[%s503 + $0x98] sm:$0xff]
    %v524 = vunpack.c.l.b16 %v132
    %v525 = vunpack.c.l.b16 %v142
    %v526 = vunpack.c.l.b16 %v156
    %v527 = vunpack.c.l.b16 %v166
    %v528 = vunpack.c.l.b16 %v180
    %v529 = vunpack.c.l.b16 %v190
    %v530 = vunpack.c.l.b16 %v204
    %v531 = vunpack.c.l.b16 %v214
    %v532 = vunpack.c.l.b16 %v228
    %v533 = vunpack.c.l.b16 %v238
    %v534 = vunpack.c.l.b16 %v252
    %v535 = vunpack.c.l.b16 %v262
    %v536 = vunpack.c.l.b16 %v276
    %v537 = vunpack.c.l.b16 %v286
    %v538 = vunpack.c.l.b16 %v300
    %v539 = vunpack.c.l.b16 %v310
    %v540 = vunpack.c.l.b16 %v324
    %v541 = vunpack.c.l.b16 %v334
    %v542 = vunpack.c.l.b16 %v348
    %v543 = vunpack.c.l.b16 %v358
    %v544 = vunpack.c.l.b16 %v372
    %v545 = vunpack.c.l.b16 %v382
    %v546 = vunpack.c.l.b16 %v396
    %v547 = vunpack.c.l.b16 %v406
    %v548 = vunpack.c.l.b16 %v420
    %v549 = vunpack.c.l.b16 %v430
    %v550 = vunpack.c.l.b16 %v444
    %v551 = vunpack.c.l.b16 %v454
    %v552 = vunpack.c.l.b16 %v468
    %v553 = vunpack.c.l.b16 %v478
    %v554 = vunpack.c.l.b16 %v492
    %v555 = vunpack.c.l.b16 %v502
    %v556 = vpack.c.b16 %v525, %v524
    %v557 = vpack.c.b16 %v527, %v526
    %v558 = vpack.c.b16 %v529, %v528
    %v559 = vpack.c.b16 %v531, %v530
    %v560 = vpack.c.b16 %v533, %v532
    %v561 = vpack.c.b16 %v535, %v534
    %v562 = vpack.c.b16 %v537, %v536
    %v563 = vpack.c.b16 %v539, %v538
    %v564 = vpack.c.b16 %v541, %v540
    %v565 = vpack.c.b16 %v543, %v542
    %v566 = vpack.c.b16 %v545, %v544
    %v567 = vpack.c.b16 %v547, %v546
    %v568 = vpack.c.b16 %v549, %v548
    %v569 = vpack.c.b16 %v551, %v550
    %v570 = vpack.c.b16 %v553, %v552
    %v571 = vpack.c.b16 %v555, %v554
    %v592 = vunpack.c.l.b16 %v504
    %v593 = vunpack.c.h.b16 %v504
    %v594 = vunpack.c.l.b16 %v505
    %v595 = vunpack.c.h.b16 %v505
    %v596 = vunpack.c.l.b16 %v506
    %v597 = vunpack.c.h.b16 %v506
    %v598 = vunpack.c.l.b16 %v507
    %v599 = vunpack.c.h.b16 %v507
    %v600 = vunpack.c.l.b16 %v508
    %v601 = vunpack.c.h.b16 %v508
    %v602 = vunpack.c.l.b16 %v509
    %v603 = vunpack.c.h.b16 %v509
    %v604 = vunpack.c.l.b16 %v510
    %v605 = vunpack.c.h.b16 %v510
    %v606 = vunpack.c.l.b16 %v511
    %v607 = vunpack.c.h.b16 %v511
    %v608 = vunpack.c.l.b16 %v512
    %v609 = vunpack.c.h.b16 %v512
    %v610 = vunpack.c.l.b16 %v513
    %v611 = vunpack.c.h.b16 %v513
    %v612 = vunpack.c.l.b16 %v514
    %v613 = vunpack.c.h.b16 %v514
    %v614 = vunpack.c.l.b16 %v515
    %v615 = vunpack.c.h.b16 %v515
    %v616 = vunpack.c.l.b16 %v516
    %v617 = vunpack.c.h.b16 %v516
    %v618 = vunpack.c.l.b16 %v517
    %v619 = vunpack.c.h.b16 %v517
    %v620 = vunpack.c.l.b16 %v518
    %v621 = vunpack.c.h.b16 %v518
    %v622 = vunpack.c.l.b16 %v519
    %v623 = vunpack.c.h.b16 %v519
    %v624 = vunpack.c.l.b16 %v520
    %v625 = vunpack.c.h.b16 %v520
    %v626 = vunpack.c.l.b16 %v521
    %v627 = vunpack.c.h.b16 %v521
    %v628 = vunpack.c.l.b16 %v522
    %v629 = vunpack.c.h.b16 %v522
    %v630 = vunpack.c.l.b16 %v523
    %v631 = vunpack.c.h.b16 %v523
    %v632 = vpack.c.b16 %v596, %v592
    %v633 = vpack.c.b16 %v597, %v593
    %v634 = vpack.c.b16 %v598, %v594
    %v635 = vpack.c.b16 %v599, %v595
    %v636 = vpack.c.b16 %v604, %v600
    %v637 = vpack.c.b16 %v605, %v601
    %v638 = vpack.c.b16 %v606, %v602
    %v639 = vpack.c.b16 %v607, %v603
    %v640 = vpack.c.b16 %v612, %v608
    %v641 = vpack.c.b16 %v613, %v609
    %v642 = vpack.c.b16 %v614, %v610
    %v643 = vpack.c.b16 %v615, %v611
    %v644 = vpack.c.b16 %v620, %v616
    %v645 = vpack.c.b16 %v621, %v617
    %v646 = vpack.c.b16 %v622, %v618
    %v647 = vpack.c.b16 %v623, %v619
    %v648 = vpack.c.b16 %v628, %v624
    %v649 = vpack.c.b16 %v629, %v625
    %v650 = vpack.c.b16 %v630, %v626
    %v651 = vpack.c.b16 %v631, %v627
    %vm672 = vcmask 654336
    %v674 = vsel %vm672, %v556, 0
    %v677 = vsel %vm672, %v557, 0
    %v680 = vsel %vm672, %v558, 0
    %v683 = vsel %vm672, %v559, 0
    %v686 = vsel %vm672, %v560, 0
    %v689 = vsel %vm672, %v561, 0
    %v692 = vsel %vm672, %v562, 0
    %v695 = vsel %vm672, %v563, 0
    %v698 = vsel %vm672, %v564, 0
    %v701 = vsel %vm672, %v565, 0
    %v704 = vsel %vm672, %v566, 0
    %v707 = vsel %vm672, %v567, 0
    %v710 = vsel %vm672, %v568, 0
    %v713 = vsel %vm672, %v569, 0
    %v716 = vsel %vm672, %v570, 0
    %v719 = vsel %vm672, %v571, 0
    %721 = vmatpush.bf16.msra.mxu0 0
    %722 = vmatpush.bf16.msra.mxu0 0
    %723 = vmatpush.bf16.msra.mxu0 0
    %724 = vmatpush.bf16.msra.mxu0 %v648
    %725 = vmatpush.bf16.msra.mxu0 %v644
    %726 = vmatpush.bf16.msra.mxu0 %v640
    %727 = vmatpush.bf16.msra.mxu0 %v636
    %728 = vmatpush.bf16.msra.mxu0 %v632
    %729 = vmatmul.bf16.gmra.mxu0 %v674
    %v730 = vpop.f32.mrf.mxu0
    %v731 = vadd.f32 0.0, %v730
    %v732 = vpop.f32.mrf.mxu0
    %v733 = vadd.f32 0.0, %v732
    %734 = vmatmul.bf16.gmra.mxu0 %v677
    %v735 = vpop.f32.mrf.mxu0
    %v736 = vadd.f32 0.0, %v735
    %v737 = vpop.f32.mrf.mxu0
    %v738 = vadd.f32 0.0, %v737
    %739 = vmatmul.bf16.gmra.mxu0 %v680
    %v740 = vpop.f32.mrf.mxu0
    %v741 = vadd.f32 0.0, %v740
    %v742 = vpop.f32.mrf.mxu0
    %v743 = vadd.f32 0.0, %v742
    %744 = vmatmul.bf16.gmra.mxu0 %v683
    %v745 = vpop.f32.mrf.mxu0
    %v746 = vadd.f32 0.0, %v745
    %v747 = vpop.f32.mrf.mxu0
    %v748 = vadd.f32 0.0, %v747
    %749 = vmatmul.bf16.gmra.mxu0 %v686
    %v750 = vpop.f32.mrf.mxu0
    %v751 = vadd.f32 0.0, %v750
    %v752 = vpop.f32.mrf.mxu0
    %v753 = vadd.f32 0.0, %v752
    %754 = vmatmul.bf16.gmra.mxu0 %v689
    %v755 = vpop.f32.mrf.mxu0
    %v756 = vadd.f32 0.0, %v755
    %v757 = vpop.f32.mrf.mxu0
    %v758 = vadd.f32 0.0, %v757
    %759 = vmatmul.bf16.gmra.mxu0 %v692
    %v760 = vpop.f32.mrf.mxu0
    %v761 = vadd.f32 0.0, %v760
    %v762 = vpop.f32.mrf.mxu0
    %v763 = vadd.f32 0.0, %v762
    %764 = vmatmul.bf16.gmra.mxu0 %v695
    %v765 = vpop.f32.mrf.mxu0
    %v766 = vadd.f32 0.0, %v765
    %v767 = vpop.f32.mrf.mxu0
    %v768 = vadd.f32 0.0, %v767
    %769 = vmatmul.bf16.gmra.mxu0 %v698
    %v770 = vpop.f32.mrf.mxu0
    %v771 = vadd.f32 0.0, %v770
    %v772 = vpop.f32.mrf.mxu0
    %v773 = vadd.f32 0.0, %v772
    %774 = vmatmul.bf16.gmra.mxu0 %v701
    %v775 = vpop.f32.mrf.mxu0
    %v776 = vadd.f32 0.0, %v775
    %v777 = vpop.f32.mrf.mxu0
    %v778 = vadd.f32 0.0, %v777
    %779 = vmatmul.bf16.gmra.mxu0 %v704
    %v780 = vpop.f32.mrf.mxu0
    %v781 = vadd.f32 0.0, %v780
    %v782 = vpop.f32.mrf.mxu0
    %v783 = vadd.f32 0.0, %v782
    %784 = vmatmul.bf16.gmra.mxu0 %v707
    %v785 = vpop.f32.mrf.mxu0
    %v786 = vadd.f32 0.0, %v785
    %v787 = vpop.f32.mrf.mxu0
    %v788 = vadd.f32 0.0, %v787
    %789 = vmatmul.bf16.gmra.mxu0 %v710
    %v790 = vpop.f32.mrf.mxu0
    %v791 = vadd.f32 0.0, %v790
    %v792 = vpop.f32.mrf.mxu0
    %v793 = vadd.f32 0.0, %v792
    %794 = vmatmul.bf16.gmra.mxu0 %v713
    %v795 = vpop.f32.mrf.mxu0
    %v796 = vadd.f32 0.0, %v795
    %v797 = vpop.f32.mrf.mxu0
    %v798 = vadd.f32 0.0, %v797
    %799 = vmatmul.bf16.gmra.mxu0 %v716
    %v800 = vpop.f32.mrf.mxu0
    %v801 = vadd.f32 0.0, %v800
    %v802 = vpop.f32.mrf.mxu0
    %v803 = vadd.f32 0.0, %v802
    %804 = vmatmul.bf16.gmra.mxu0 %v719
    %v805 = vpop.f32.mrf.mxu0
    %v806 = vadd.f32 0.0, %v805
    %v807 = vpop.f32.mrf.mxu0
    %v808 = vadd.f32 0.0, %v807
    %809 = vdwg.mxu0
    %810 = vmatpush.bf16.msra.mxu0 0
    %811 = vmatpush.bf16.msra.mxu0 0
    %812 = vmatpush.bf16.msra.mxu0 0
    %813 = vmatpush.bf16.msra.mxu0 %v649
    %814 = vmatpush.bf16.msra.mxu0 %v645
    %815 = vmatpush.bf16.msra.mxu0 %v641
    %816 = vmatpush.bf16.msra.mxu0 %v637
    %817 = vmatpush.bf16.msra.mxu0 %v633
    %818 = vmatmul.bf16.gmra.mxu0 %v674
    %v819 = vpop.f32.mrf.mxu0
    %v820 = vadd.f32 0.0, %v819
    %v821 = vpop.f32.mrf.mxu0
    %v822 = vadd.f32 0.0, %v821
    %823 = vmatmul.bf16.gmra.mxu0 %v677
    %v824 = vpop.f32.mrf.mxu0
    %v825 = vadd.f32 0.0, %v824
    %v826 = vpop.f32.mrf.mxu0
    %v827 = vadd.f32 0.0, %v826
    %828 = vmatmul.bf16.gmra.mxu0 %v680
    %v829 = vpop.f32.mrf.mxu0
    %v830 = vadd.f32 0.0, %v829
    %v831 = vpop.f32.mrf.mxu0
    %v832 = vadd.f32 0.0, %v831
    %833 = vmatmul.bf16.gmra.mxu0 %v683
    %v834 = vpop.f32.mrf.mxu0
    %v835 = vadd.f32 0.0, %v834
    %v836 = vpop.f32.mrf.mxu0
    %v837 = vadd.f32 0.0, %v836
    %838 = vmatmul.bf16.gmra.mxu0 %v686
    %v839 = vpop.f32.mrf.mxu0
    %v840 = vadd.f32 0.0, %v839
    %v841 = vpop.f32.mrf.mxu0
    %v842 = vadd.f32 0.0, %v841
    %843 = vmatmul.bf16.gmra.mxu0 %v689
    %v844 = vpop.f32.mrf.mxu0
    %v845 = vadd.f32 0.0, %v844
    %v846 = vpop.f32.mrf.mxu0
    %v847 = vadd.f32 0.0, %v846
    %848 = vmatmul.bf16.gmra.mxu0 %v692
    %v849 = vpop.f32.mrf.mxu0
    %v850 = vadd.f32 0.0, %v849
    %v851 = vpop.f32.mrf.mxu0
    %v852 = vadd.f32 0.0, %v851
    %853 = vmatmul.bf16.gmra.mxu0 %v695
    %v854 = vpop.f32.mrf.mxu0
    %v855 = vadd.f32 0.0, %v854
    %v856 = vpop.f32.mrf.mxu0
    %v857 = vadd.f32 0.0, %v856
    %858 = vmatmul.bf16.gmra.mxu0 %v698
    %v859 = vpop.f32.mrf.mxu0
    %v860 = vadd.f32 0.0, %v859
    %v861 = vpop.f32.mrf.mxu0
    %v862 = vadd.f32 0.0, %v861
    %863 = vmatmul.bf16.gmra.mxu0 %v701
    %v864 = vpop.f32.mrf.mxu0
    %v865 = vadd.f32 0.0, %v864
    %v866 = vpop.f32.mrf.mxu0
    %v867 = vadd.f32 0.0, %v866
    %868 = vmatmul.bf16.gmra.mxu0 %v704
    %v869 = vpop.f32.mrf.mxu0
    %v870 = vadd.f32 0.0, %v869
    %v871 = vpop.f32.mrf.mxu0
    %v872 = vadd.f32 0.0, %v871
    %873 = vmatmul.bf16.gmra.mxu0 %v707
    %v874 = vpop.f32.mrf.mxu0
    %v875 = vadd.f32 0.0, %v874
    %v876 = vpop.f32.mrf.mxu0
    %v877 = vadd.f32 0.0, %v876
    %878 = vmatmul.bf16.gmra.mxu0 %v710
    %v879 = vpop.f32.mrf.mxu0
    %v880 = vadd.f32 0.0, %v879
    %v881 = vpop.f32.mrf.mxu0
    %v882 = vadd.f32 0.0, %v881
    %883 = vmatmul.bf16.gmra.mxu0 %v713
    %v884 = vpop.f32.mrf.mxu0
    %v885 = vadd.f32 0.0, %v884
    %v886 = vpop.f32.mrf.mxu0
    %v887 = vadd.f32 0.0, %v886
    %888 = vmatmul.bf16.gmra.mxu0 %v716
    %v889 = vpop.f32.mrf.mxu0
    %v890 = vadd.f32 0.0, %v889
    %v891 = vpop.f32.mrf.mxu0
    %v892 = vadd.f32 0.0, %v891
    %893 = vmatmul.bf16.gmra.mxu0 %v719
    %v894 = vpop.f32.mrf.mxu0
    %v895 = vadd.f32 0.0, %v894
    %v896 = vpop.f32.mrf.mxu0
    %v897 = vadd.f32 0.0, %v896
    %898 = vdwg.mxu0
    %899 = vmatpush.bf16.msra.mxu0 0
    %900 = vmatpush.bf16.msra.mxu0 0
    %901 = vmatpush.bf16.msra.mxu0 0
    %902 = vmatpush.bf16.msra.mxu0 %v650
    %903 = vmatpush.bf16.msra.mxu0 %v646
    %904 = vmatpush.bf16.msra.mxu0 %v642
    %905 = vmatpush.bf16.msra.mxu0 %v638
    %906 = vmatpush.bf16.msra.mxu0 %v634
    %907 = vmatmul.bf16.gmra.mxu0 %v674
    %v908 = vpop.f32.mrf.mxu0
    %v909 = vadd.f32 0.0, %v908
    %v910 = vpop.f32.mrf.mxu0
    %v911 = vadd.f32 0.0, %v910
    %912 = vmatmul.bf16.gmra.mxu0 %v677
    %v913 = vpop.f32.mrf.mxu0
    %v914 = vadd.f32 0.0, %v913
    %v915 = vpop.f32.mrf.mxu0
    %v916 = vadd.f32 0.0, %v915
    %917 = vmatmul.bf16.gmra.mxu0 %v680
    %v918 = vpop.f32.mrf.mxu0
    %v919 = vadd.f32 0.0, %v918
    %v920 = vpop.f32.mrf.mxu0
    %v921 = vadd.f32 0.0, %v920
    %922 = vmatmul.bf16.gmra.mxu0 %v683
    %v923 = vpop.f32.mrf.mxu0
    %v924 = vadd.f32 0.0, %v923
    %v925 = vpop.f32.mrf.mxu0
    %v926 = vadd.f32 0.0, %v925
    %927 = vmatmul.bf16.gmra.mxu0 %v686
    %v928 = vpop.f32.mrf.mxu0
    %v929 = vadd.f32 0.0, %v928
    %v930 = vpop.f32.mrf.mxu0
    %v931 = vadd.f32 0.0, %v930
    %932 = vmatmul.bf16.gmra.mxu0 %v689
    %v933 = vpop.f32.mrf.mxu0
    %v934 = vadd.f32 0.0, %v933
    %v935 = vpop.f32.mrf.mxu0
    %v936 = vadd.f32 0.0, %v935
    %937 = vmatmul.bf16.gmra.mxu0 %v692
    %v938 = vpop.f32.mrf.mxu0
    %v939 = vadd.f32 0.0, %v938
    %v940 = vpop.f32.mrf.mxu0
    %v941 = vadd.f32 0.0, %v940
    %942 = vmatmul.bf16.gmra.mxu0 %v695
    %v943 = vpop.f32.mrf.mxu0
    %v944 = vadd.f32 0.0, %v943
    %v945 = vpop.f32.mrf.mxu0
    %v946 = vadd.f32 0.0, %v945
    %947 = vmatmul.bf16.gmra.mxu0 %v698
    %v948 = vpop.f32.mrf.mxu0
    %v949 = vadd.f32 0.0, %v948
    %v950 = vpop.f32.mrf.mxu0
    %v951 = vadd.f32 0.0, %v950
    %952 = vmatmul.bf16.gmra.mxu0 %v701
    %v953 = vpop.f32.mrf.mxu0
    %v954 = vadd.f32 0.0, %v953
    %v955 = vpop.f32.mrf.mxu0
    %v956 = vadd.f32 0.0, %v955
    %957 = vmatmul.bf16.gmra.mxu0 %v704
    %v958 = vpop.f32.mrf.mxu0
    %v959 = vadd.f32 0.0, %v958
    %v960 = vpop.f32.mrf.mxu0
    %v961 = vadd.f32 0.0, %v960
    %962 = vmatmul.bf16.gmra.mxu0 %v707
    %v963 = vpop.f32.mrf.mxu0
    %v964 = vadd.f32 0.0, %v963
    %v965 = vpop.f32.mrf.mxu0
    %v966 = vadd.f32 0.0, %v965
    %967 = vmatmul.bf16.gmra.mxu0 %v710
    %v968 = vpop.f32.mrf.mxu0
    %v969 = vadd.f32 0.0, %v968
    %v970 = vpop.f32.mrf.mxu0
    %v971 = vadd.f32 0.0, %v970
    %972 = vmatmul.bf16.gmra.mxu0 %v713
    %v973 = vpop.f32.mrf.mxu0
    %v974 = vadd.f32 0.0, %v973
    %v975 = vpop.f32.mrf.mxu0
    %v976 = vadd.f32 0.0, %v975
    %977 = vmatmul.bf16.gmra.mxu0 %v716
    %v978 = vpop.f32.mrf.mxu0
    %v979 = vadd.f32 0.0, %v978
    %v980 = vpop.f32.mrf.mxu0
    %v981 = vadd.f32 0.0, %v980
    %982 = vmatmul.bf16.gmra.mxu0 %v719
    %v983 = vpop.f32.mrf.mxu0
    %v984 = vadd.f32 0.0, %v983
    %v985 = vpop.f32.mrf.mxu0
    %v986 = vadd.f32 0.0, %v985
    %987 = vdwg.mxu0
    %988 = vmatpush.bf16.msra.mxu0 0
    %989 = vmatpush.bf16.msra.mxu0 0
    %990 = vmatpush.bf16.msra.mxu0 0
    %991 = vmatpush.bf16.msra.mxu0 %v651
    %992 = vmatpush.bf16.msra.mxu0 %v647
    %993 = vmatpush.bf16.msra.mxu0 %v643
    %994 = vmatpush.bf16.msra.mxu0 %v639
    %995 = vmatpush.bf16.msra.mxu0 %v635
    %996 = vmatmul.bf16.gmra.mxu0 %v674
    %v997 = vpop.f32.mrf.mxu0
    %v998 = vadd.f32 0.0, %v997
    %v999 = vpop.f32.mrf.mxu0
    %v1000 = vadd.f32 0.0, %v999
    %1001 = vmatmul.bf16.gmra.mxu0 %v677
    %v1002 = vpop.f32.mrf.mxu0
    %v1003 = vadd.f32 0.0, %v1002
    %v1004 = vpop.f32.mrf.mxu0
    %v1005 = vadd.f32 0.0, %v1004
    %1006 = vmatmul.bf16.gmra.mxu0 %v680
    %v1007 = vpop.f32.mrf.mxu0
    %v1008 = vadd.f32 0.0, %v1007
    %v1009 = vpop.f32.mrf.mxu0
    %v1010 = vadd.f32 0.0, %v1009
    %1011 = vmatmul.bf16.gmra.mxu0 %v683
    %v1012 = vpop.f32.mrf.mxu0
    %v1013 = vadd.f32 0.0, %v1012
    %v1014 = vpop.f32.mrf.mxu0
    %v1015 = vadd.f32 0.0, %v1014
    %1016 = vmatmul.bf16.gmra.mxu0 %v686
    %v1017 = vpop.f32.mrf.mxu0
    %v1018 = vadd.f32 0.0, %v1017
    %v1019 = vpop.f32.mrf.mxu0
    %v1020 = vadd.f32 0.0, %v1019
    %1021 = vmatmul.bf16.gmra.mxu0 %v689
    %v1022 = vpop.f32.mrf.mxu0
    %v1023 = vadd.f32 0.0, %v1022
    %v1024 = vpop.f32.mrf.mxu0
    %v1025 = vadd.f32 0.0, %v1024
    %1026 = vmatmul.bf16.gmra.mxu0 %v692
    %v1027 = vpop.f32.mrf.mxu0
    %v1028 = vadd.f32 0.0, %v1027
    %v1029 = vpop.f32.mrf.mxu0
    %v1030 = vadd.f32 0.0, %v1029
    %1031 = vmatmul.bf16.gmra.mxu0 %v695
    %v1032 = vpop.f32.mrf.mxu0
    %v1033 = vadd.f32 0.0, %v1032
    %v1034 = vpop.f32.mrf.mxu0
    %v1035 = vadd.f32 0.0, %v1034
    %1036 = vmatmul.bf16.gmra.mxu0 %v698
    %v1037 = vpop.f32.mrf.mxu0
    %v1038 = vadd.f32 0.0, %v1037
    %v1039 = vpop.f32.mrf.mxu0
    %v1040 = vadd.f32 0.0, %v1039
    %1041 = vmatmul.bf16.gmra.mxu0 %v701
    %v1042 = vpop.f32.mrf.mxu0
    %v1043 = vadd.f32 0.0, %v1042
    %v1044 = vpop.f32.mrf.mxu0
    %v1045 = vadd.f32 0.0, %v1044
    %1046 = vmatmul.bf16.gmra.mxu0 %v704
    %v1047 = vpop.f32.mrf.mxu0
    %v1048 = vadd.f32 0.0, %v1047
    %v1049 = vpop.f32.mrf.mxu0
    %v1050 = vadd.f32 0.0, %v1049
    %1051 = vmatmul.bf16.gmra.mxu0 %v707
    %v1052 = vpop.f32.mrf.mxu0
    %v1053 = vadd.f32 0.0, %v1052
    %v1054 = vpop.f32.mrf.mxu0
    %v1055 = vadd.f32 0.0, %v1054
    %1056 = vmatmul.bf16.gmra.mxu0 %v710
    %v1057 = vpop.f32.mrf.mxu0
    %v1058 = vadd.f32 0.0, %v1057
    %v1059 = vpop.f32.mrf.mxu0
    %v1060 = vadd.f32 0.0, %v1059
    %1061 = vmatmul.bf16.gmra.mxu0 %v713
    %v1062 = vpop.f32.mrf.mxu0
    %v1063 = vadd.f32 0.0, %v1062
    %v1064 = vpop.f32.mrf.mxu0
    %v1065 = vadd.f32 0.0, %v1064
    %1066 = vmatmul.bf16.gmra.mxu0 %v716
    %v1067 = vpop.f32.mrf.mxu0
    %v1068 = vadd.f32 0.0, %v1067
    %v1069 = vpop.f32.mrf.mxu0
    %v1070 = vadd.f32 0.0, %v1069
    %1071 = vmatmul.bf16.gmra.mxu0 %v719
    %v1072 = vpop.f32.mrf.mxu0
    %v1073 = vadd.f32 0.0, %v1072
    %v1074 = vpop.f32.mrf.mxu0
    %v1075 = vadd.f32 0.0, %v1074
    %1076 = vdwg.mxu0
    %v1109 = vunpack.c.l.b16 %v48
    %v1110 = vunpack.c.l.b16 %v49
    %v1111 = vunpack.c.l.b16 %v51
    %v1112 = vunpack.c.l.b16 %v52
    %v1113 = vunpack.c.l.b16 %v54
    %v1114 = vunpack.c.l.b16 %v55
    %v1115 = vunpack.c.l.b16 %v57
    %v1116 = vunpack.c.l.b16 %v58
    %v1117 = vunpack.c.l.b16 %v60
    %v1118 = vunpack.c.l.b16 %v61
    %v1119 = vunpack.c.l.b16 %v63
    %v1120 = vunpack.c.l.b16 %v64
    %v1121 = vunpack.c.l.b16 %v66
    %v1122 = vunpack.c.l.b16 %v67
    %v1123 = vunpack.c.l.b16 %v69
    %v1124 = vunpack.c.l.b16 %v70
    %v1125 = vunpack.c.l.b16 %v72
    %v1126 = vunpack.c.l.b16 %v73
    %v1127 = vunpack.c.l.b16 %v75
    %v1128 = vunpack.c.l.b16 %v76
    %v1129 = vunpack.c.l.b16 %v78
    %v1130 = vunpack.c.l.b16 %v79
    %v1131 = vunpack.c.l.b16 %v81
    %v1132 = vunpack.c.l.b16 %v82
    %v1133 = vunpack.c.l.b16 %v84
    %v1134 = vunpack.c.l.b16 %v85
    %v1135 = vunpack.c.l.b16 %v87
    %v1136 = vunpack.c.l.b16 %v88
    %v1137 = vunpack.c.l.b16 %v90
    %v1138 = vunpack.c.l.b16 %v91
    %v1139 = vunpack.c.l.b16 %v93
    %v1140 = vunpack.c.l.b16 %v94
    %v1141 = vpack.c.b16 %v1110, %v1109
    %v1142 = vpack.c.b16 %v1112, %v1111
    %v1143 = vpack.c.b16 %v1114, %v1113
    %v1144 = vpack.c.b16 %v1116, %v1115
    %v1145 = vpack.c.b16 %v1118, %v1117
    %v1146 = vpack.c.b16 %v1120, %v1119
    %v1147 = vpack.c.b16 %v1122, %v1121
    %v1148 = vpack.c.b16 %v1124, %v1123
    %v1149 = vpack.c.b16 %v1126, %v1125
    %v1150 = vpack.c.b16 %v1128, %v1127
    %v1151 = vpack.c.b16 %v1130, %v1129
    %v1152 = vpack.c.b16 %v1132, %v1131
    %v1153 = vpack.c.b16 %v1134, %v1133
    %v1154 = vpack.c.b16 %v1136, %v1135
    %v1155 = vpack.c.b16 %v1138, %v1137
    %v1156 = vpack.c.b16 %v1140, %v1139
    %v1177 = vunpack.c.l.b16 %v96
    %v1178 = vunpack.c.h.b16 %v96
    %v1179 = vunpack.c.l.b16 %v97
    %v1180 = vunpack.c.h.b16 %v97
    %v1181 = vunpack.c.l.b16 %v98
    %v1182 = vunpack.c.h.b16 %v98
    %v1183 = vunpack.c.l.b16 %v99
    %v1184 = vunpack.c.h.b16 %v99
    %v1185 = vunpack.c.l.b16 %v100
    %v1186 = vunpack.c.h.b16 %v100
    %v1187 = vunpack.c.l.b16 %v101
    %v1188 = vunpack.c.h.b16 %v101
    %v1189 = vunpack.c.l.b16 %v102
    %v1190 = vunpack.c.h.b16 %v102
    %v1191 = vunpack.c.l.b16 %v103
    %v1192 = vunpack.c.h.b16 %v103
    %v1193 = vunpack.c.l.b16 %v104
    %v1194 = vunpack.c.h.b16 %v104
    %v1195 = vunpack.c.l.b16 %v105
    %v1196 = vunpack.c.h.b16 %v105
    %v1197 = vunpack.c.l.b16 %v106
    %v1198 = vunpack.c.h.b16 %v106
    %v1199 = vunpack.c.l.b16 %v107
    %v1200 = vunpack.c.h.b16 %v107
    %v1201 = vunpack.c.l.b16 %v108
    %v1202 = vunpack.c.h.b16 %v108
    %v1203 = vunpack.c.l.b16 %v109
    %v1204 = vunpack.c.h.b16 %v109
    %v1205 = vunpack.c.l.b16 %v110
    %v1206 = vunpack.c.h.b16 %v110
    %v1207 = vunpack.c.l.b16 %v111
    %v1208 = vunpack.c.h.b16 %v111
    %v1209 = vunpack.c.l.b16 %v112
    %v1210 = vunpack.c.h.b16 %v112
    %v1211 = vunpack.c.l.b16 %v113
    %v1212 = vunpack.c.h.b16 %v113
    %v1213 = vunpack.c.l.b16 %v114
    %v1214 = vunpack.c.h.b16 %v114
    %v1215 = vunpack.c.l.b16 %v115
    %v1216 = vunpack.c.h.b16 %v115
    %v1217 = vpack.c.b16 %v1181, %v1177
    %v1218 = vpack.c.b16 %v1182, %v1178
    %v1219 = vpack.c.b16 %v1183, %v1179
    %v1220 = vpack.c.b16 %v1184, %v1180
    %v1221 = vpack.c.b16 %v1189, %v1185
    %v1222 = vpack.c.b16 %v1190, %v1186
    %v1223 = vpack.c.b16 %v1191, %v1187
    %v1224 = vpack.c.b16 %v1192, %v1188
    %v1225 = vpack.c.b16 %v1197, %v1193
    %v1226 = vpack.c.b16 %v1198, %v1194
    %v1227 = vpack.c.b16 %v1199, %v1195
    %v1228 = vpack.c.b16 %v1200, %v1196
    %v1229 = vpack.c.b16 %v1205, %v1201
    %v1230 = vpack.c.b16 %v1206, %v1202
    %v1231 = vpack.c.b16 %v1207, %v1203
    %v1232 = vpack.c.b16 %v1208, %v1204
    %v1233 = vpack.c.b16 %v1213, %v1209
    %v1234 = vpack.c.b16 %v1214, %v1210
    %v1235 = vpack.c.b16 %v1215, %v1211
    %v1236 = vpack.c.b16 %v1216, %v1212
    %v1258 = vsel %vm672, %v1141, 0
    %v1261 = vsel %vm672, %v1142, 0
    %v1264 = vsel %vm672, %v1143, 0
    %v1267 = vsel %vm672, %v1144, 0
    %v1270 = vsel %vm672, %v1145, 0
    %v1273 = vsel %vm672, %v1146, 0
    %v1276 = vsel %vm672, %v1147, 0
    %v1279 = vsel %vm672, %v1148, 0
    %v1282 = vsel %vm672, %v1149, 0
    %v1285 = vsel %vm672, %v1150, 0
    %v1288 = vsel %vm672, %v1151, 0
    %v1291 = vsel %vm672, %v1152, 0
    %v1294 = vsel %vm672, %v1153, 0
    %v1297 = vsel %vm672, %v1154, 0
    %v1300 = vsel %vm672, %v1155, 0
    %v1303 = vsel %vm672, %v1156, 0
    %1305 = vmatpush.bf16.msra.mxu0 0
    %1306 = vmatpush.bf16.msra.mxu0 0
    %1307 = vmatpush.bf16.msra.mxu0 0
    %1308 = vmatpush.bf16.msra.mxu0 %v1233
    %1309 = vmatpush.bf16.msra.mxu0 %v1229
    %1310 = vmatpush.bf16.msra.mxu0 %v1225
    %1311 = vmatpush.bf16.msra.mxu0 %v1221
    %1312 = vmatpush.bf16.msra.mxu0 %v1217
    %1313 = vmatmul.bf16.gmra.mxu0 %v1258
    %v1314 = vpop.f32.mrf.mxu0
    %v1315 = vadd.f32 %v731, %v1314
    %v1316 = vpop.f32.mrf.mxu0
    %v1317 = vadd.f32 %v733, %v1316
    %1318 = vmatmul.bf16.gmra.mxu0 %v1261
    %v1319 = vpop.f32.mrf.mxu0
    %v1320 = vadd.f32 %v736, %v1319
    %v1321 = vpop.f32.mrf.mxu0
    %v1322 = vadd.f32 %v738, %v1321
    %1323 = vmatmul.bf16.gmra.mxu0 %v1264
    %v1324 = vpop.f32.mrf.mxu0
    %v1325 = vadd.f32 %v741, %v1324
    %v1326 = vpop.f32.mrf.mxu0
    %v1327 = vadd.f32 %v743, %v1326
    %1328 = vmatmul.bf16.gmra.mxu0 %v1267
    %v1329 = vpop.f32.mrf.mxu0
    %v1330 = vadd.f32 %v746, %v1329
    %v1331 = vpop.f32.mrf.mxu0
    %v1332 = vadd.f32 %v748, %v1331
    %1333 = vmatmul.bf16.gmra.mxu0 %v1270
    %v1334 = vpop.f32.mrf.mxu0
    %v1335 = vadd.f32 %v751, %v1334
    %v1336 = vpop.f32.mrf.mxu0
    %v1337 = vadd.f32 %v753, %v1336
    %1338 = vmatmul.bf16.gmra.mxu0 %v1273
    %v1339 = vpop.f32.mrf.mxu0
    %v1340 = vadd.f32 %v756, %v1339
    %v1341 = vpop.f32.mrf.mxu0
    %v1342 = vadd.f32 %v758, %v1341
    %1343 = vmatmul.bf16.gmra.mxu0 %v1276
    %v1344 = vpop.f32.mrf.mxu0
    %v1345 = vadd.f32 %v761, %v1344
    %v1346 = vpop.f32.mrf.mxu0
    %v1347 = vadd.f32 %v763, %v1346
    %1348 = vmatmul.bf16.gmra.mxu0 %v1279
    %v1349 = vpop.f32.mrf.mxu0
    %v1350 = vadd.f32 %v766, %v1349
    %v1351 = vpop.f32.mrf.mxu0
    %v1352 = vadd.f32 %v768, %v1351
    %1353 = vmatmul.bf16.gmra.mxu0 %v1282
    %v1354 = vpop.f32.mrf.mxu0
    %v1355 = vadd.f32 %v771, %v1354
    %v1356 = vpop.f32.mrf.mxu0
    %v1357 = vadd.f32 %v773, %v1356
    %1358 = vmatmul.bf16.gmra.mxu0 %v1285
    %v1359 = vpop.f32.mrf.mxu0
    %v1360 = vadd.f32 %v776, %v1359
    %v1361 = vpop.f32.mrf.mxu0
    %v1362 = vadd.f32 %v778, %v1361
    %1363 = vmatmul.bf16.gmra.mxu0 %v1288
    %v1364 = vpop.f32.mrf.mxu0
    %v1365 = vadd.f32 %v781, %v1364
    %v1366 = vpop.f32.mrf.mxu0
    %v1367 = vadd.f32 %v783, %v1366
    %1368 = vmatmul.bf16.gmra.mxu0 %v1291
    %v1369 = vpop.f32.mrf.mxu0
    %v1370 = vadd.f32 %v786, %v1369
    %v1371 = vpop.f32.mrf.mxu0
    %v1372 = vadd.f32 %v788, %v1371
    %1373 = vmatmul.bf16.gmra.mxu0 %v1294
    %v1374 = vpop.f32.mrf.mxu0
    %v1375 = vadd.f32 %v791, %v1374
    %v1376 = vpop.f32.mrf.mxu0
    %v1377 = vadd.f32 %v793, %v1376
    %1378 = vmatmul.bf16.gmra.mxu0 %v1297
    %v1379 = vpop.f32.mrf.mxu0
    %v1380 = vadd.f32 %v796, %v1379
    %v1381 = vpop.f32.mrf.mxu0
    %v1382 = vadd.f32 %v798, %v1381
    %1383 = vmatmul.bf16.gmra.mxu0 %v1300
    %v1384 = vpop.f32.mrf.mxu0
    %v1385 = vadd.f32 %v801, %v1384
    %v1386 = vpop.f32.mrf.mxu0
    %v1387 = vadd.f32 %v803, %v1386
    %1388 = vmatmul.bf16.gmra.mxu0 %v1303
    %v1389 = vpop.f32.mrf.mxu0
    %v1390 = vadd.f32 %v806, %v1389
    %v1391 = vpop.f32.mrf.mxu0
    %v1392 = vadd.f32 %v808, %v1391
    %1393 = vdwg.mxu0
    %1394 = vmatpush.bf16.msra.mxu0 0
    %1395 = vmatpush.bf16.msra.mxu0 0
    %1396 = vmatpush.bf16.msra.mxu0 0
    %1397 = vmatpush.bf16.msra.mxu0 %v1234
    %1398 = vmatpush.bf16.msra.mxu0 %v1230
    %1399 = vmatpush.bf16.msra.mxu0 %v1226
    %1400 = vmatpush.bf16.msra.mxu0 %v1222
    %1401 = vmatpush.bf16.msra.mxu0 %v1218
    %1402 = vmatmul.bf16.gmra.mxu0 %v1258
    %v1403 = vpop.f32.mrf.mxu0
    %v1404 = vadd.f32 %v820, %v1403
    %v1405 = vpop.f32.mrf.mxu0
    %v1406 = vadd.f32 %v822, %v1405
    %1407 = vmatmul.bf16.gmra.mxu0 %v1261
    %v1408 = vpop.f32.mrf.mxu0
    %v1409 = vadd.f32 %v825, %v1408
    %v1410 = vpop.f32.mrf.mxu0
    %v1411 = vadd.f32 %v827, %v1410
    %1412 = vmatmul.bf16.gmra.mxu0 %v1264
    %v1413 = vpop.f32.mrf.mxu0
    %v1414 = vadd.f32 %v830, %v1413
    %v1415 = vpop.f32.mrf.mxu0
    %v1416 = vadd.f32 %v832, %v1415
    %1417 = vmatmul.bf16.gmra.mxu0 %v1267
    %v1418 = vpop.f32.mrf.mxu0
    %v1419 = vadd.f32 %v835, %v1418
    %v1420 = vpop.f32.mrf.mxu0
    %v1421 = vadd.f32 %v837, %v1420
    %1422 = vmatmul.bf16.gmra.mxu0 %v1270
    %v1423 = vpop.f32.mrf.mxu0
    %v1424 = vadd.f32 %v840, %v1423
    %v1425 = vpop.f32.mrf.mxu0
    %v1426 = vadd.f32 %v842, %v1425
    %1427 = vmatmul.bf16.gmra.mxu0 %v1273
    %v1428 = vpop.f32.mrf.mxu0
    %v1429 = vadd.f32 %v845, %v1428
    %v1430 = vpop.f32.mrf.mxu0
    %v1431 = vadd.f32 %v847, %v1430
    %1432 = vmatmul.bf16.gmra.mxu0 %v1276
    %v1433 = vpop.f32.mrf.mxu0
    %v1434 = vadd.f32 %v850, %v1433
    %v1435 = vpop.f32.mrf.mxu0
    %v1436 = vadd.f32 %v852, %v1435
    %1437 = vmatmul.bf16.gmra.mxu0 %v1279
    %v1438 = vpop.f32.mrf.mxu0
    %v1439 = vadd.f32 %v855, %v1438
    %v1440 = vpop.f32.mrf.mxu0
    %v1441 = vadd.f32 %v857, %v1440
    %1442 = vmatmul.bf16.gmra.mxu0 %v1282
    %v1443 = vpop.f32.mrf.mxu0
    %v1444 = vadd.f32 %v860, %v1443
    %v1445 = vpop.f32.mrf.mxu0
    %v1446 = vadd.f32 %v862, %v1445
    %1447 = vmatmul.bf16.gmra.mxu0 %v1285
    %v1448 = vpop.f32.mrf.mxu0
    %v1449 = vadd.f32 %v865, %v1448
    %v1450 = vpop.f32.mrf.mxu0
    %v1451 = vadd.f32 %v867, %v1450
    %1452 = vmatmul.bf16.gmra.mxu0 %v1288
    %v1453 = vpop.f32.mrf.mxu0
    %v1454 = vadd.f32 %v870, %v1453
    %v1455 = vpop.f32.mrf.mxu0
    %v1456 = vadd.f32 %v872, %v1455
    %1457 = vmatmul.bf16.gmra.mxu0 %v1291
    %v1458 = vpop.f32.mrf.mxu0
    %v1459 = vadd.f32 %v875, %v1458
    %v1460 = vpop.f32.mrf.mxu0
    %v1461 = vadd.f32 %v877, %v1460
    %1462 = vmatmul.bf16.gmra.mxu0 %v1294
    %v1463 = vpop.f32.mrf.mxu0
    %v1464 = vadd.f32 %v880, %v1463
    %v1465 = vpop.f32.mrf.mxu0
    %v1466 = vadd.f32 %v882, %v1465
    %1467 = vmatmul.bf16.gmra.mxu0 %v1297
    %v1468 = vpop.f32.mrf.mxu0
    %v1469 = vadd.f32 %v885, %v1468
    %v1470 = vpop.f32.mrf.mxu0
    %v1471 = vadd.f32 %v887, %v1470
    %1472 = vmatmul.bf16.gmra.mxu0 %v1300
    %v1473 = vpop.f32.mrf.mxu0
    %v1474 = vadd.f32 %v890, %v1473
    %v1475 = vpop.f32.mrf.mxu0
    %v1476 = vadd.f32 %v892, %v1475
    %1477 = vmatmul.bf16.gmra.mxu0 %v1303
    %v1478 = vpop.f32.mrf.mxu0
    %v1479 = vadd.f32 %v895, %v1478
    %v1480 = vpop.f32.mrf.mxu0
    %v1481 = vadd.f32 %v897, %v1480
    %1482 = vdwg.mxu0
    %1483 = vmatpush.bf16.msra.mxu0 0
    %1484 = vmatpush.bf16.msra.mxu0 0
    %1485 = vmatpush.bf16.msra.mxu0 0
    %1486 = vmatpush.bf16.msra.mxu0 %v1235
    %1487 = vmatpush.bf16.msra.mxu0 %v1231
    %1488 = vmatpush.bf16.msra.mxu0 %v1227
    %1489 = vmatpush.bf16.msra.mxu0 %v1223
    %1490 = vmatpush.bf16.msra.mxu0 %v1219
    %1491 = vmatmul.bf16.gmra.mxu0 %v1258
    %v1492 = vpop.f32.mrf.mxu0
    %v1493 = vadd.f32 %v909, %v1492
    %v1494 = vpop.f32.mrf.mxu0
    %v1495 = vadd.f32 %v911, %v1494
    %1496 = vmatmul.bf16.gmra.mxu0 %v1261
    %v1497 = vpop.f32.mrf.mxu0
    %v1498 = vadd.f32 %v914, %v1497
    %v1499 = vpop.f32.mrf.mxu0
    %v1500 = vadd.f32 %v916, %v1499
    %1501 = vmatmul.bf16.gmra.mxu0 %v1264
    %v1502 = vpop.f32.mrf.mxu0
    %v1503 = vadd.f32 %v919, %v1502
    %v1504 = vpop.f32.mrf.mxu0
    %v1505 = vadd.f32 %v921, %v1504
    %1506 = vmatmul.bf16.gmra.mxu0 %v1267
    %v1507 = vpop.f32.mrf.mxu0
    %v1508 = vadd.f32 %v924, %v1507
    %v1509 = vpop.f32.mrf.mxu0
    %v1510 = vadd.f32 %v926, %v1509
    %1511 = vmatmul.bf16.gmra.mxu0 %v1270
    %v1512 = vpop.f32.mrf.mxu0
    %v1513 = vadd.f32 %v929, %v1512
    %v1514 = vpop.f32.mrf.mxu0
    %v1515 = vadd.f32 %v931, %v1514
    %1516 = vmatmul.bf16.gmra.mxu0 %v1273
    %v1517 = vpop.f32.mrf.mxu0
    %v1518 = vadd.f32 %v934, %v1517
    %v1519 = vpop.f32.mrf.mxu0
    %v1520 = vadd.f32 %v936, %v1519
    %1521 = vmatmul.bf16.gmra.mxu0 %v1276
    %v1522 = vpop.f32.mrf.mxu0
    %v1523 = vadd.f32 %v939, %v1522
    %v1524 = vpop.f32.mrf.mxu0
    %v1525 = vadd.f32 %v941, %v1524
    %1526 = vmatmul.bf16.gmra.mxu0 %v1279
    %v1527 = vpop.f32.mrf.mxu0
    %v1528 = vadd.f32 %v944, %v1527
    %v1529 = vpop.f32.mrf.mxu0
    %v1530 = vadd.f32 %v946, %v1529
    %1531 = vmatmul.bf16.gmra.mxu0 %v1282
    %v1532 = vpop.f32.mrf.mxu0
    %v1533 = vadd.f32 %v949, %v1532
    %v1534 = vpop.f32.mrf.mxu0
    %v1535 = vadd.f32 %v951, %v1534
    %1536 = vmatmul.bf16.gmra.mxu0 %v1285
    %v1537 = vpop.f32.mrf.mxu0
    %v1538 = vadd.f32 %v954, %v1537
    %v1539 = vpop.f32.mrf.mxu0
    %v1540 = vadd.f32 %v956, %v1539
    %1541 = vmatmul.bf16.gmra.mxu0 %v1288
    %v1542 = vpop.f32.mrf.mxu0
    %v1543 = vadd.f32 %v959, %v1542
    %v1544 = vpop.f32.mrf.mxu0
    %v1545 = vadd.f32 %v961, %v1544
    %1546 = vmatmul.bf16.gmra.mxu0 %v1291
    %v1547 = vpop.f32.mrf.mxu0
    %v1548 = vadd.f32 %v964, %v1547
    %v1549 = vpop.f32.mrf.mxu0
    %v1550 = vadd.f32 %v966, %v1549
    %1551 = vmatmul.bf16.gmra.mxu0 %v1294
    %v1552 = vpop.f32.mrf.mxu0
    %v1553 = vadd.f32 %v969, %v1552
    %v1554 = vpop.f32.mrf.mxu0
    %v1555 = vadd.f32 %v971, %v1554
    %1556 = vmatmul.bf16.gmra.mxu0 %v1297
    %v1557 = vpop.f32.mrf.mxu0
    %v1558 = vadd.f32 %v974, %v1557
    %v1559 = vpop.f32.mrf.mxu0
    %v1560 = vadd.f32 %v976, %v1559
    %1561 = vmatmul.bf16.gmra.mxu0 %v1300
    %v1562 = vpop.f32.mrf.mxu0
    %v1563 = vadd.f32 %v979, %v1562
    %v1564 = vpop.f32.mrf.mxu0
    %v1565 = vadd.f32 %v981, %v1564
    %1566 = vmatmul.bf16.gmra.mxu0 %v1303
    %v1567 = vpop.f32.mrf.mxu0
    %v1568 = vadd.f32 %v984, %v1567
    %v1569 = vpop.f32.mrf.mxu0
    %v1570 = vadd.f32 %v986, %v1569
    %1571 = vdwg.mxu0
    %1572 = vmatpush.bf16.msra.mxu0 0
    %1573 = vmatpush.bf16.msra.mxu0 0
    %1574 = vmatpush.bf16.msra.mxu0 0
    %1575 = vmatpush.bf16.msra.mxu0 %v1236
    %1576 = vmatpush.bf16.msra.mxu0 %v1232
    %1577 = vmatpush.bf16.msra.mxu0 %v1228
    %1578 = vmatpush.bf16.msra.mxu0 %v1224
    %1579 = vmatpush.bf16.msra.mxu0 %v1220
    %1580 = vmatmul.bf16.gmra.mxu0 %v1258
    %v1581 = vpop.f32.mrf.mxu0
    %v1582 = vadd.f32 %v998, %v1581
    %v1583 = vpop.f32.mrf.mxu0
    %v1584 = vadd.f32 %v1000, %v1583
    %1585 = vmatmul.bf16.gmra.mxu0 %v1261
    %v1586 = vpop.f32.mrf.mxu0
    %v1587 = vadd.f32 %v1003, %v1586
    %v1588 = vpop.f32.mrf.mxu0
    %v1589 = vadd.f32 %v1005, %v1588
    %1590 = vmatmul.bf16.gmra.mxu0 %v1264
    %v1591 = vpop.f32.mrf.mxu0
    %v1592 = vadd.f32 %v1008, %v1591
    %v1593 = vpop.f32.mrf.mxu0
    %v1594 = vadd.f32 %v1010, %v1593
    %1595 = vmatmul.bf16.gmra.mxu0 %v1267
    %v1596 = vpop.f32.mrf.mxu0
    %v1597 = vadd.f32 %v1013, %v1596
    %v1598 = vpop.f32.mrf.mxu0
    %v1599 = vadd.f32 %v1015, %v1598
    %1600 = vmatmul.bf16.gmra.mxu0 %v1270
    %v1601 = vpop.f32.mrf.mxu0
    %v1602 = vadd.f32 %v1018, %v1601
    %v1603 = vpop.f32.mrf.mxu0
    %v1604 = vadd.f32 %v1020, %v1603
    %1605 = vmatmul.bf16.gmra.mxu0 %v1273
    %v1606 = vpop.f32.mrf.mxu0
    %v1607 = vadd.f32 %v1023, %v1606
    %v1608 = vpop.f32.mrf.mxu0
    %v1609 = vadd.f32 %v1025, %v1608
    %1610 = vmatmul.bf16.gmra.mxu0 %v1276
    %v1611 = vpop.f32.mrf.mxu0
    %v1612 = vadd.f32 %v1028, %v1611
    %v1613 = vpop.f32.mrf.mxu0
    %v1614 = vadd.f32 %v1030, %v1613
    %1615 = vmatmul.bf16.gmra.mxu0 %v1279
    %v1616 = vpop.f32.mrf.mxu0
    %v1617 = vadd.f32 %v1033, %v1616
    %v1618 = vpop.f32.mrf.mxu0
    %v1619 = vadd.f32 %v1035, %v1618
    %1620 = vmatmul.bf16.gmra.mxu0 %v1282
    %v1621 = vpop.f32.mrf.mxu0
    %v1622 = vadd.f32 %v1038, %v1621
    %v1623 = vpop.f32.mrf.mxu0
    %v1624 = vadd.f32 %v1040, %v1623
    %1625 = vmatmul.bf16.gmra.mxu0 %v1285
    %v1626 = vpop.f32.mrf.mxu0
    %v1627 = vadd.f32 %v1043, %v1626
    %v1628 = vpop.f32.mrf.mxu0
    %v1629 = vadd.f32 %v1045, %v1628
    %1630 = vmatmul.bf16.gmra.mxu0 %v1288
    %v1631 = vpop.f32.mrf.mxu0
    %v1632 = vadd.f32 %v1048, %v1631
    %v1633 = vpop.f32.mrf.mxu0
    %v1634 = vadd.f32 %v1050, %v1633
    %1635 = vmatmul.bf16.gmra.mxu0 %v1291
    %v1636 = vpop.f32.mrf.mxu0
    %v1637 = vadd.f32 %v1053, %v1636
    %v1638 = vpop.f32.mrf.mxu0
    %v1639 = vadd.f32 %v1055, %v1638
    %1640 = vmatmul.bf16.gmra.mxu0 %v1294
    %v1641 = vpop.f32.mrf.mxu0
    %v1642 = vadd.f32 %v1058, %v1641
    %v1643 = vpop.f32.mrf.mxu0
    %v1644 = vadd.f32 %v1060, %v1643
    %1645 = vmatmul.bf16.gmra.mxu0 %v1297
    %v1646 = vpop.f32.mrf.mxu0
    %v1647 = vadd.f32 %v1063, %v1646
    %v1648 = vpop.f32.mrf.mxu0
    %v1649 = vadd.f32 %v1065, %v1648
    %1650 = vmatmul.bf16.gmra.mxu0 %v1300
    %v1651 = vpop.f32.mrf.mxu0
    %v1652 = vadd.f32 %v1068, %v1651
    %v1653 = vpop.f32.mrf.mxu0
    %v1654 = vadd.f32 %v1070, %v1653
    %1655 = vmatmul.bf16.gmra.mxu0 %v1303
    %v1656 = vpop.f32.mrf.mxu0
    %v1657 = vadd.f32 %v1073, %v1656
    %v1658 = vpop.f32.mrf.mxu0
    %v1659 = vadd.f32 %v1075, %v1658
    %1660 = vdwg.mxu0
    %vm1677 = vcmask 1042432
    %vm1678 = vcmask 1046532
    %vm1679 = vmor %vm1677, %vm1678
    %v1680 = vrot.slane %v48, 5
    %v1681 = vrot.slane %v1680, 4
    %v1682 = vrot.slane %v49, 5
    %v1683 = vsel %vm1679, %v1681, %v1682
    %v1684 = vrot.slane %v1682, 4
    %v1685 = vrot.slane %v50, 5
    %v1686 = vsel %vm1679, %v1684, %v1685
    %v1687 = vrot.slane %v51, 5
    %v1688 = vrot.slane %v1687, 4
    %v1689 = vrot.slane %v52, 5
    %v1690 = vsel %vm1679, %v1688, %v1689
    %v1691 = vrot.slane %v1689, 4
    %v1692 = vrot.slane %v53, 5
    %v1693 = vsel %vm1679, %v1691, %v1692
    %v1694 = vrot.slane %v54, 5
    %v1695 = vrot.slane %v1694, 4
    %v1696 = vrot.slane %v55, 5
    %v1697 = vsel %vm1679, %v1695, %v1696
    %v1698 = vrot.slane %v1696, 4
    %v1699 = vrot.slane %v56, 5
    %v1700 = vsel %vm1679, %v1698, %v1699
    %v1701 = vrot.slane %v57, 5
    %v1702 = vrot.slane %v1701, 4
    %v1703 = vrot.slane %v58, 5
    %v1704 = vsel %vm1679, %v1702, %v1703
    %v1705 = vrot.slane %v1703, 4
    %v1706 = vrot.slane %v59, 5
    %v1707 = vsel %vm1679, %v1705, %v1706
    %v1708 = vrot.slane %v60, 5
    %v1709 = vrot.slane %v1708, 4
    %v1710 = vrot.slane %v61, 5
    %v1711 = vsel %vm1679, %v1709, %v1710
    %v1712 = vrot.slane %v1710, 4
    %v1713 = vrot.slane %v62, 5
    %v1714 = vsel %vm1679, %v1712, %v1713
    %v1715 = vrot.slane %v63, 5
    %v1716 = vrot.slane %v1715, 4
    %v1717 = vrot.slane %v64, 5
    %v1718 = vsel %vm1679, %v1716, %v1717
    %v1719 = vrot.slane %v1717, 4
    %v1720 = vrot.slane %v65, 5
    %v1721 = vsel %vm1679, %v1719, %v1720
    %v1722 = vrot.slane %v66, 5
    %v1723 = vrot.slane %v1722, 4
    %v1724 = vrot.slane %v67, 5
    %v1725 = vsel %vm1679, %v1723, %v1724
    %v1726 = vrot.slane %v1724, 4
    %v1727 = vrot.slane %v68, 5
    %v1728 = vsel %vm1679, %v1726, %v1727
    %v1729 = vrot.slane %v69, 5
    %v1730 = vrot.slane %v1729, 4
    %v1731 = vrot.slane %v70, 5
    %v1732 = vsel %vm1679, %v1730, %v1731
    %v1733 = vrot.slane %v1731, 4
    %v1734 = vrot.slane %v71, 5
    %v1735 = vsel %vm1679, %v1733, %v1734
    %v1736 = vrot.slane %v72, 5
    %v1737 = vrot.slane %v1736, 4
    %v1738 = vrot.slane %v73, 5
    %v1739 = vsel %vm1679, %v1737, %v1738
    %v1740 = vrot.slane %v1738, 4
    %v1741 = vrot.slane %v74, 5
    %v1742 = vsel %vm1679, %v1740, %v1741
    %v1743 = vrot.slane %v75, 5
    %v1744 = vrot.slane %v1743, 4
    %v1745 = vrot.slane %v76, 5
    %v1746 = vsel %vm1679, %v1744, %v1745
    %v1747 = vrot.slane %v1745, 4
    %v1748 = vrot.slane %v77, 5
    %v1749 = vsel %vm1679, %v1747, %v1748
    %v1750 = vrot.slane %v78, 5
    %v1751 = vrot.slane %v1750, 4
    %v1752 = vrot.slane %v79, 5
    %v1753 = vsel %vm1679, %v1751, %v1752
    %v1754 = vrot.slane %v1752, 4
    %v1755 = vrot.slane %v80, 5
    %v1756 = vsel %vm1679, %v1754, %v1755
    %v1757 = vrot.slane %v81, 5
    %v1758 = vrot.slane %v1757, 4
    %v1759 = vrot.slane %v82, 5
    %v1760 = vsel %vm1679, %v1758, %v1759
    %v1761 = vrot.slane %v1759, 4
    %v1762 = vrot.slane %v83, 5
    %v1763 = vsel %vm1679, %v1761, %v1762
    %v1764 = vrot.slane %v84, 5
    %v1765 = vrot.slane %v1764, 4
    %v1766 = vrot.slane %v85, 5
    %v1767 = vsel %vm1679, %v1765, %v1766
    %v1768 = vrot.slane %v1766, 4
    %v1769 = vrot.slane %v86, 5
    %v1770 = vsel %vm1679, %v1768, %v1769
    %v1771 = vrot.slane %v87, 5
    %v1772 = vrot.slane %v1771, 4
    %v1773 = vrot.slane %v88, 5
    %v1774 = vsel %vm1679, %v1772, %v1773
    %v1775 = vrot.slane %v1773, 4
    %v1776 = vrot.slane %v89, 5
    %v1777 = vsel %vm1679, %v1775, %v1776
    %v1778 = vrot.slane %v90, 5
    %v1779 = vrot.slane %v1778, 4
    %v1780 = vrot.slane %v91, 5
    %v1781 = vsel %vm1679, %v1779, %v1780
    %v1782 = vrot.slane %v1780, 4
    %v1783 = vrot.slane %v92, 5
    %v1784 = vsel %vm1679, %v1782, %v1783
    %v1785 = vrot.slane %v93, 5
    %v1786 = vrot.slane %v1785, 4
    %v1787 = vrot.slane %v94, 5
    %v1788 = vsel %vm1679, %v1786, %v1787
    %v1789 = vrot.slane %v1787, 4
    %v1790 = vrot.slane %v95, 5
    %v1791 = vsel %vm1679, %v1789, %v1790
    %s1792 = scalar_lea.vmem [#allocation2], 320
    %v1793 = vld [vmem:[%s1792] sm:$0xff]
    %v1794 = vld [vmem:[%s1792 + $0x8] sm:$0xff]
    %v1795 = vld [vmem:[%s1792 + $0x10] sm:$0xff]
    %v1796 = vld [vmem:[%s1792 + $0x18] sm:$0xff]
    %v1797 = vld [vmem:[%s1792 + $0x20] sm:$0xff]
    %v1798 = vld [vmem:[%s1792 + $0x28] sm:$0xff]
    %v1799 = vld [vmem:[%s1792 + $0x30] sm:$0xff]
    %v1800 = vld [vmem:[%s1792 + $0x38] sm:$0xff]
    %v1801 = vld [vmem:[%s1792 + $0x40] sm:$0xff]
    %v1802 = vld [vmem:[%s1792 + $0x48] sm:$0xff]
    %v1803 = vld [vmem:[%s1792 + $0x50] sm:$0xff]
    %v1804 = vld [vmem:[%s1792 + $0x58] sm:$0xff]
    %v1805 = vld [vmem:[%s1792 + $0x60] sm:$0xff]
    %v1806 = vld [vmem:[%s1792 + $0x68] sm:$0xff]
    %v1807 = vld [vmem:[%s1792 + $0x70] sm:$0xff]
    %v1808 = vld [vmem:[%s1792 + $0x78] sm:$0xff]
    %v1809 = vld [vmem:[%s1792 + $0x80] sm:$0xff]
    %v1810 = vld [vmem:[%s1792 + $0x88] sm:$0xff]
    %v1811 = vld [vmem:[%s1792 + $0x90] sm:$0xff]
    %v1812 = vld [vmem:[%s1792 + $0x98] sm:$0xff]
    %v1813 = vunpack.c.l.b16 %v1683
    %v1814 = vunpack.c.l.b16 %v1686
    %v1815 = vunpack.c.l.b16 %v1690
    %v1816 = vunpack.c.l.b16 %v1693
    %v1817 = vunpack.c.l.b16 %v1697
    %v1818 = vunpack.c.l.b16 %v1700
    %v1819 = vunpack.c.l.b16 %v1704
    %v1820 = vunpack.c.l.b16 %v1707
    %v1821 = vunpack.c.l.b16 %v1711
    %v1822 = vunpack.c.l.b16 %v1714
    %v1823 = vunpack.c.l.b16 %v1718
    %v1824 = vunpack.c.l.b16 %v1721
    %v1825 = vunpack.c.l.b16 %v1725
    %v1826 = vunpack.c.l.b16 %v1728
    %v1827 = vunpack.c.l.b16 %v1732
    %v1828 = vunpack.c.l.b16 %v1735
    %v1829 = vunpack.c.l.b16 %v1739
    %v1830 = vunpack.c.l.b16 %v1742
    %v1831 = vunpack.c.l.b16 %v1746
    %v1832 = vunpack.c.l.b16 %v1749
    %v1833 = vunpack.c.l.b16 %v1753
    %v1834 = vunpack.c.l.b16 %v1756
    %v1835 = vunpack.c.l.b16 %v1760
    %v1836 = vunpack.c.l.b16 %v1763
    %v1837 = vunpack.c.l.b16 %v1767
    %v1838 = vunpack.c.l.b16 %v1770
    %v1839 = vunpack.c.l.b16 %v1774
    %v1840 = vunpack.c.l.b16 %v1777
    %v1841 = vunpack.c.l.b16 %v1781
    %v1842 = vunpack.c.l.b16 %v1784
    %v1843 = vunpack.c.l.b16 %v1788
    %v1844 = vunpack.c.l.b16 %v1791
    %v1845 = vpack.c.b16 %v1814, %v1813
    %v1846 = vpack.c.b16 %v1816, %v1815
    %v1847 = vpack.c.b16 %v1818, %v1817
    %v1848 = vpack.c.b16 %v1820, %v1819
    %v1849 = vpack.c.b16 %v1822, %v1821
    %v1850 = vpack.c.b16 %v1824, %v1823
    %v1851 = vpack.c.b16 %v1826, %v1825
    %v1852 = vpack.c.b16 %v1828, %v1827
    %v1853 = vpack.c.b16 %v1830, %v1829
    %v1854 = vpack.c.b16 %v1832, %v1831
    %v1855 = vpack.c.b16 %v1834, %v1833
    %v1856 = vpack.c.b16 %v1836, %v1835
    %v1857 = vpack.c.b16 %v1838, %v1837
    %v1858 = vpack.c.b16 %v1840, %v1839
    %v1859 = vpack.c.b16 %v1842, %v1841
    %v1860 = vpack.c.b16 %v1844, %v1843
    %v1881 = vunpack.c.l.b16 %v1793
    %v1882 = vunpack.c.h.b16 %v1793
    %v1883 = vunpack.c.l.b16 %v1794
    %v1884 = vunpack.c.h.b16 %v1794
    %v1885 = vunpack.c.l.b16 %v1795
    %v1886 = vunpack.c.h.b16 %v1795
    %v1887 = vunpack.c.l.b16 %v1796
    %v1888 = vunpack.c.h.b16 %v1796
    %v1889 = vunpack.c.l.b16 %v1797
    %v1890 = vunpack.c.h.b16 %v1797
    %v1891 = vunpack.c.l.b16 %v1798
    %v1892 = vunpack.c.h.b16 %v1798
    %v1893 = vunpack.c.l.b16 %v1799
    %v1894 = vunpack.c.h.b16 %v1799
    %v1895 = vunpack.c.l.b16 %v1800
    %v1896 = vunpack.c.h.b16 %v1800
    %v1897 = vunpack.c.l.b16 %v1801
    %v1898 = vunpack.c.h.b16 %v1801
    %v1899 = vunpack.c.l.b16 %v1802
    %v1900 = vunpack.c.h.b16 %v1802
    %v1901 = vunpack.c.l.b16 %v1803
    %v1902 = vunpack.c.h.b16 %v1803
    %v1903 = vunpack.c.l.b16 %v1804
    %v1904 = vunpack.c.h.b16 %v1804
    %v1905 = vunpack.c.l.b16 %v1805
    %v1906 = vunpack.c.h.b16 %v1805
    %v1907 = vunpack.c.l.b16 %v1806
    %v1908 = vunpack.c.h.b16 %v1806
    %v1909 = vunpack.c.l.b16 %v1807
    %v1910 = vunpack.c.h.b16 %v1807
    %v1911 = vunpack.c.l.b16 %v1808
    %v1912 = vunpack.c.h.b16 %v1808
    %v1913 = vunpack.c.l.b16 %v1809
    %v1914 = vunpack.c.h.b16 %v1809
    %v1915 = vunpack.c.l.b16 %v1810
    %v1916 = vunpack.c.h.b16 %v1810
    %v1917 = vunpack.c.l.b16 %v1811
    %v1918 = vunpack.c.h.b16 %v1811
    %v1919 = vunpack.c.l.b16 %v1812
    %v1920 = vunpack.c.h.b16 %v1812
    %v1921 = vpack.c.b16 %v1885, %v1881
    %v1922 = vpack.c.b16 %v1886, %v1882
    %v1923 = vpack.c.b16 %v1887, %v1883
    %v1924 = vpack.c.b16 %v1888, %v1884
    %v1925 = vpack.c.b16 %v1893, %v1889
    %v1926 = vpack.c.b16 %v1894, %v1890
    %v1927 = vpack.c.b16 %v1895, %v1891
    %v1928 = vpack.c.b16 %v1896, %v1892
    %v1929 = vpack.c.b16 %v1901, %v1897
    %v1930 = vpack.c.b16 %v1902, %v1898
    %v1931 = vpack.c.b16 %v1903, %v1899
    %v1932 = vpack.c.b16 %v1904, %v1900
    %v1933 = vpack.c.b16 %v1909, %v1905
    %v1934 = vpack.c.b16 %v1910, %v1906
    %v1935 = vpack.c.b16 %v1911, %v1907
    %v1936 = vpack.c.b16 %v1912, %v1908
    %v1937 = vpack.c.b16 %v1917, %v1913
    %v1938 = vpack.c.b16 %v1918, %v1914
    %v1939 = vpack.c.b16 %v1919, %v1915
    %v1940 = vpack.c.b16 %v1920, %v1916
    %v1962 = vsel %vm672, %v1845, 0
    %v1965 = vsel %vm672, %v1846, 0
    %v1968 = vsel %vm672, %v1847, 0
    %v1971 = vsel %vm672, %v1848, 0
    %v1974 = vsel %vm672, %v1849, 0
    %v1977 = vsel %vm672, %v1850, 0
    %v1980 = vsel %vm672, %v1851, 0
    %v1983 = vsel %vm672, %v1852, 0
    %v1986 = vsel %vm672, %v1853, 0
    %v1989 = vsel %vm672, %v1854, 0
    %v1992 = vsel %vm672, %v1855, 0
    %v1995 = vsel %vm672, %v1856, 0
    %v1998 = vsel %vm672, %v1857, 0
    %v2001 = vsel %vm672, %v1858, 0
    %v2004 = vsel %vm672, %v1859, 0
    %v2007 = vsel %vm672, %v1860, 0
    %2009 = vmatpush.bf16.msra.mxu0 0
    %2010 = vmatpush.bf16.msra.mxu0 0
    %2011 = vmatpush.bf16.msra.mxu0 0
    %2012 = vmatpush.bf16.msra.mxu0 %v1937
    %2013 = vmatpush.bf16.msra.mxu0 %v1933
    %2014 = vmatpush.bf16.msra.mxu0 %v1929
    %2015 = vmatpush.bf16.msra.mxu0 %v1925
    %2016 = vmatpush.bf16.msra.mxu0 %v1921
    %2017 = vmatmul.bf16.gmra.mxu0 %v1962
    %v2018 = vpop.f32.mrf.mxu0
    %v2019 = vadd.f32 0.0, %v2018
    %v2020 = vpop.f32.mrf.mxu0
    %v2021 = vadd.f32 0.0, %v2020
    %2022 = vmatmul.bf16.gmra.mxu0 %v1965
    %v2023 = vpop.f32.mrf.mxu0
    %v2024 = vadd.f32 0.0, %v2023
    %v2025 = vpop.f32.mrf.mxu0
    %v2026 = vadd.f32 0.0, %v2025
    %2027 = vmatmul.bf16.gmra.mxu0 %v1968
    %v2028 = vpop.f32.mrf.mxu0
    %v2029 = vadd.f32 0.0, %v2028
    %v2030 = vpop.f32.mrf.mxu0
    %v2031 = vadd.f32 0.0, %v2030
    %2032 = vmatmul.bf16.gmra.mxu0 %v1971
    %v2033 = vpop.f32.mrf.mxu0
    %v2034 = vadd.f32 0.0, %v2033
    %v2035 = vpop.f32.mrf.mxu0
    %v2036 = vadd.f32 0.0, %v2035
    %2037 = vmatmul.bf16.gmra.mxu0 %v1974
    %v2038 = vpop.f32.mrf.mxu0
    %v2039 = vadd.f32 0.0, %v2038
    %v2040 = vpop.f32.mrf.mxu0
    %v2041 = vadd.f32 0.0, %v2040
    %2042 = vmatmul.bf16.gmra.mxu0 %v1977
    %v2043 = vpop.f32.mrf.mxu0
    %v2044 = vadd.f32 0.0, %v2043
    %v2045 = vpop.f32.mrf.mxu0
    %v2046 = vadd.f32 0.0, %v2045
    %2047 = vmatmul.bf16.gmra.mxu0 %v1980
    %v2048 = vpop.f32.mrf.mxu0
    %v2049 = vadd.f32 0.0, %v2048
    %v2050 = vpop.f32.mrf.mxu0
    %v2051 = vadd.f32 0.0, %v2050
    %2052 = vmatmul.bf16.gmra.mxu0 %v1983
    %v2053 = vpop.f32.mrf.mxu0
    %v2054 = vadd.f32 0.0, %v2053
    %v2055 = vpop.f32.mrf.mxu0
    %v2056 = vadd.f32 0.0, %v2055
    %2057 = vmatmul.bf16.gmra.mxu0 %v1986
    %v2058 = vpop.f32.mrf.mxu0
    %v2059 = vadd.f32 0.0, %v2058
    %v2060 = vpop.f32.mrf.mxu0
    %v2061 = vadd.f32 0.0, %v2060
    %2062 = vmatmul.bf16.gmra.mxu0 %v1989
    %v2063 = vpop.f32.mrf.mxu0
    %v2064 = vadd.f32 0.0, %v2063
    %v2065 = vpop.f32.mrf.mxu0
    %v2066 = vadd.f32 0.0, %v2065
    %2067 = vmatmul.bf16.gmra.mxu0 %v1992
    %v2068 = vpop.f32.mrf.mxu0
    %v2069 = vadd.f32 0.0, %v2068
    %v2070 = vpop.f32.mrf.mxu0
    %v2071 = vadd.f32 0.0, %v2070
    %2072 = vmatmul.bf16.gmra.mxu0 %v1995
    %v2073 = vpop.f32.mrf.mxu0
    %v2074 = vadd.f32 0.0, %v2073
    %v2075 = vpop.f32.mrf.mxu0
    %v2076 = vadd.f32 0.0, %v2075
    %2077 = vmatmul.bf16.gmra.mxu0 %v1998
    %v2078 = vpop.f32.mrf.mxu0
    %v2079 = vadd.f32 0.0, %v2078
    %v2080 = vpop.f32.mrf.mxu0
    %v2081 = vadd.f32 0.0, %v2080
    %2082 = vmatmul.bf16.gmra.mxu0 %v2001
    %v2083 = vpop.f32.mrf.mxu0
    %v2084 = vadd.f32 0.0, %v2083
    %v2085 = vpop.f32.mrf.mxu0
    %v2086 = vadd.f32 0.0, %v2085
    %2087 = vmatmul.bf16.gmra.mxu0 %v2004
    %v2088 = vpop.f32.mrf.mxu0
    %v2089 = vadd.f32 0.0, %v2088
    %v2090 = vpop.f32.mrf.mxu0
    %v2091 = vadd.f32 0.0, %v2090
    %2092 = vmatmul.bf16.gmra.mxu0 %v2007
    %v2093 = vpop.f32.mrf.mxu0
    %v2094 = vadd.f32 0.0, %v2093
    %v2095 = vpop.f32.mrf.mxu0
    %v2096 = vadd.f32 0.0, %v2095
    %2097 = vdwg.mxu0
    %2098 = vmatpush.bf16.msra.mxu0 0
    %2099 = vmatpush.bf16.msra.mxu0 0
    %2100 = vmatpush.bf16.msra.mxu0 0
    %2101 = vmatpush.bf16.msra.mxu0 %v1938
    %2102 = vmatpush.bf16.msra.mxu0 %v1934
    %2103 = vmatpush.bf16.msra.mxu0 %v1930
    %2104 = vmatpush.bf16.msra.mxu0 %v1926
    %2105 = vmatpush.bf16.msra.mxu0 %v1922
    %2106 = vmatmul.bf16.gmra.mxu0 %v1962
    %v2107 = vpop.f32.mrf.mxu0
    %v2108 = vadd.f32 0.0, %v2107
    %v2109 = vpop.f32.mrf.mxu0
    %v2110 = vadd.f32 0.0, %v2109
    %2111 = vmatmul.bf16.gmra.mxu0 %v1965
    %v2112 = vpop.f32.mrf.mxu0
    %v2113 = vadd.f32 0.0, %v2112
    %v2114 = vpop.f32.mrf.mxu0
    %v2115 = vadd.f32 0.0, %v2114
    %2116 = vmatmul.bf16.gmra.mxu0 %v1968
    %v2117 = vpop.f32.mrf.mxu0
    %v2118 = vadd.f32 0.0, %v2117
    %v2119 = vpop.f32.mrf.mxu0
    %v2120 = vadd.f32 0.0, %v2119
    %2121 = vmatmul.bf16.gmra.mxu0 %v1971
    %v2122 = vpop.f32.mrf.mxu0
    %v2123 = vadd.f32 0.0, %v2122
    %v2124 = vpop.f32.mrf.mxu0
    %v2125 = vadd.f32 0.0, %v2124
    %2126 = vmatmul.bf16.gmra.mxu0 %v1974
    %v2127 = vpop.f32.mrf.mxu0
    %v2128 = vadd.f32 0.0, %v2127
    %v2129 = vpop.f32.mrf.mxu0
    %v2130 = vadd.f32 0.0, %v2129
    %2131 = vmatmul.bf16.gmra.mxu0 %v1977
    %v2132 = vpop.f32.mrf.mxu0
    %v2133 = vadd.f32 0.0, %v2132
    %v2134 = vpop.f32.mrf.mxu0
    %v2135 = vadd.f32 0.0, %v2134
    %2136 = vmatmul.bf16.gmra.mxu0 %v1980
    %v2137 = vpop.f32.mrf.mxu0
    %v2138 = vadd.f32 0.0, %v2137
    %v2139 = vpop.f32.mrf.mxu0
    %v2140 = vadd.f32 0.0, %v2139
    %2141 = vmatmul.bf16.gmra.mxu0 %v1983
    %v2142 = vpop.f32.mrf.mxu0
    %v2143 = vadd.f32 0.0, %v2142
    %v2144 = vpop.f32.mrf.mxu0
    %v2145 = vadd.f32 0.0, %v2144
    %2146 = vmatmul.bf16.gmra.mxu0 %v1986
    %v2147 = vpop.f32.mrf.mxu0
    %v2148 = vadd.f32 0.0, %v2147
    %v2149 = vpop.f32.mrf.mxu0
    %v2150 = vadd.f32 0.0, %v2149
    %2151 = vmatmul.bf16.gmra.mxu0 %v1989
    %v2152 = vpop.f32.mrf.mxu0
    %v2153 = vadd.f32 0.0, %v2152
    %v2154 = vpop.f32.mrf.mxu0
    %v2155 = vadd.f32 0.0, %v2154
    %2156 = vmatmul.bf16.gmra.mxu0 %v1992
    %v2157 = vpop.f32.mrf.mxu0
    %v2158 = vadd.f32 0.0, %v2157
    %v2159 = vpop.f32.mrf.mxu0
    %v2160 = vadd.f32 0.0, %v2159
    %2161 = vmatmul.bf16.gmra.mxu0 %v1995
    %v2162 = vpop.f32.mrf.mxu0
    %v2163 = vadd.f32 0.0, %v2162
    %v2164 = vpop.f32.mrf.mxu0
    %v2165 = vadd.f32 0.0, %v2164
    %2166 = vmatmul.bf16.gmra.mxu0 %v1998
    %v2167 = vpop.f32.mrf.mxu0
    %v2168 = vadd.f32 0.0, %v2167
    %v2169 = vpop.f32.mrf.mxu0
    %v2170 = vadd.f32 0.0, %v2169
    %2171 = vmatmul.bf16.gmra.mxu0 %v2001
    %v2172 = vpop.f32.mrf.mxu0
    %v2173 = vadd.f32 0.0, %v2172
    %v2174 = vpop.f32.mrf.mxu0
    %v2175 = vadd.f32 0.0, %v2174
    %2176 = vmatmul.bf16.gmra.mxu0 %v2004
    %v2177 = vpop.f32.mrf.mxu0
    %v2178 = vadd.f32 0.0, %v2177
    %v2179 = vpop.f32.mrf.mxu0
    %v2180 = vadd.f32 0.0, %v2179
    %2181 = vmatmul.bf16.gmra.mxu0 %v2007
    %v2182 = vpop.f32.mrf.mxu0
    %v2183 = vadd.f32 0.0, %v2182
    %v2184 = vpop.f32.mrf.mxu0
    %v2185 = vadd.f32 0.0, %v2184
    %2186 = vdwg.mxu0
    %2187 = vmatpush.bf16.msra.mxu0 0
    %2188 = vmatpush.bf16.msra.mxu0 0
    %2189 = vmatpush.bf16.msra.mxu0 0
    %2190 = vmatpush.bf16.msra.mxu0 %v1939
    %2191 = vmatpush.bf16.msra.mxu0 %v1935
    %2192 = vmatpush.bf16.msra.mxu0 %v1931
    %2193 = vmatpush.bf16.msra.mxu0 %v1927
    %2194 = vmatpush.bf16.msra.mxu0 %v1923
    %2195 = vmatmul.bf16.gmra.mxu0 %v1962
    %v2196 = vpop.f32.mrf.mxu0
    %v2197 = vadd.f32 0.0, %v2196
    %v2198 = vpop.f32.mrf.mxu0
    %v2199 = vadd.f32 0.0, %v2198
    %2200 = vmatmul.bf16.gmra.mxu0 %v1965
    %v2201 = vpop.f32.mrf.mxu0
    %v2202 = vadd.f32 0.0, %v2201
    %v2203 = vpop.f32.mrf.mxu0
    %v2204 = vadd.f32 0.0, %v2203
    %2205 = vmatmul.bf16.gmra.mxu0 %v1968
    %v2206 = vpop.f32.mrf.mxu0
    %v2207 = vadd.f32 0.0, %v2206
    %v2208 = vpop.f32.mrf.mxu0
    %v2209 = vadd.f32 0.0, %v2208
    %2210 = vmatmul.bf16.gmra.mxu0 %v1971
    %v2211 = vpop.f32.mrf.mxu0
    %v2212 = vadd.f32 0.0, %v2211
    %v2213 = vpop.f32.mrf.mxu0
    %v2214 = vadd.f32 0.0, %v2213
    %2215 = vmatmul.bf16.gmra.mxu0 %v1974
    %v2216 = vpop.f32.mrf.mxu0
    %v2217 = vadd.f32 0.0, %v2216
    %v2218 = vpop.f32.mrf.mxu0
    %v2219 = vadd.f32 0.0, %v2218
    %2220 = vmatmul.bf16.gmra.mxu0 %v1977
    %v2221 = vpop.f32.mrf.mxu0
    %v2222 = vadd.f32 0.0, %v2221
    %v2223 = vpop.f32.mrf.mxu0
    %v2224 = vadd.f32 0.0, %v2223
    %2225 = vmatmul.bf16.gmra.mxu0 %v1980
    %v2226 = vpop.f32.mrf.mxu0
    %v2227 = vadd.f32 0.0, %v2226
    %v2228 = vpop.f32.mrf.mxu0
    %v2229 = vadd.f32 0.0, %v2228
    %2230 = vmatmul.bf16.gmra.mxu0 %v1983
    %v2231 = vpop.f32.mrf.mxu0
    %v2232 = vadd.f32 0.0, %v2231
    %v2233 = vpop.f32.mrf.mxu0
    %v2234 = vadd.f32 0.0, %v2233
    %2235 = vmatmul.bf16.gmra.mxu0 %v1986
    %v2236 = vpop.f32.mrf.mxu0
    %v2237 = vadd.f32 0.0, %v2236
    %v2238 = vpop.f32.mrf.mxu0
    %v2239 = vadd.f32 0.0, %v2238
    %2240 = vmatmul.bf16.gmra.mxu0 %v1989
    %v2241 = vpop.f32.mrf.mxu0
    %v2242 = vadd.f32 0.0, %v2241
    %v2243 = vpop.f32.mrf.mxu0
    %v2244 = vadd.f32 0.0, %v2243
    %2245 = vmatmul.bf16.gmra.mxu0 %v1992
    %v2246 = vpop.f32.mrf.mxu0
    %v2247 = vadd.f32 0.0, %v2246
    %v2248 = vpop.f32.mrf.mxu0
    %v2249 = vadd.f32 0.0, %v2248
    %2250 = vmatmul.bf16.gmra.mxu0 %v1995
    %v2251 = vpop.f32.mrf.mxu0
    %v2252 = vadd.f32 0.0, %v2251
    %v2253 = vpop.f32.mrf.mxu0
    %v2254 = vadd.f32 0.0, %v2253
    %2255 = vmatmul.bf16.gmra.mxu0 %v1998
    %v2256 = vpop.f32.mrf.mxu0
    %v2257 = vadd.f32 0.0, %v2256
    %v2258 = vpop.f32.mrf.mxu0
    %v2259 = vadd.f32 0.0, %v2258
    %2260 = vmatmul.bf16.gmra.mxu0 %v2001
    %v2261 = vpop.f32.mrf.mxu0
    %v2262 = vadd.f32 0.0, %v2261
    %v2263 = vpop.f32.mrf.mxu0
    %v2264 = vadd.f32 0.0, %v2263
    %2265 = vmatmul.bf16.gmra.mxu0 %v2004
    %v2266 = vpop.f32.mrf.mxu0
    %v2267 = vadd.f32 0.0, %v2266
    %v2268 = vpop.f32.mrf.mxu0
    %v2269 = vadd.f32 0.0, %v2268
    %2270 = vmatmul.bf16.gmra.mxu0 %v2007
    %v2271 = vpop.f32.mrf.mxu0
    %v2272 = vadd.f32 0.0, %v2271
    %v2273 = vpop.f32.mrf.mxu0
    %v2274 = vadd.f32 0.0, %v2273
    %2275 = vdwg.mxu0
    %2276 = vmatpush.bf16.msra.mxu0 0
    %2277 = vmatpush.bf16.msra.mxu0 0
    %2278 = vmatpush.bf16.msra.mxu0 0
    %2279 = vmatpush.bf16.msra.mxu0 %v1940
    %2280 = vmatpush.bf16.msra.mxu0 %v1936
    %2281 = vmatpush.bf16.msra.mxu0 %v1932
    %2282 = vmatpush.bf16.msra.mxu0 %v1928
    %2283 = vmatpush.bf16.msra.mxu0 %v1924
    %2284 = vmatmul.bf16.gmra.mxu0 %v1962
    %v2285 = vpop.f32.mrf.mxu0
    %v2286 = vadd.f32 0.0, %v2285
    %v2287 = vpop.f32.mrf.mxu0
    %v2288 = vadd.f32 0.0, %v2287
    %2289 = vmatmul.bf16.gmra.mxu0 %v1965
    %v2290 = vpop.f32.mrf.mxu0
    %v2291 = vadd.f32 0.0, %v2290
    %v2292 = vpop.f32.mrf.mxu0
    %v2293 = vadd.f32 0.0, %v2292
    %2294 = vmatmul.bf16.gmra.mxu0 %v1968
    %v2295 = vpop.f32.mrf.mxu0
    %v2296 = vadd.f32 0.0, %v2295
    %v2297 = vpop.f32.mrf.mxu0
    %v2298 = vadd.f32 0.0, %v2297
    %2299 = vmatmul.bf16.gmra.mxu0 %v1971
    %v2300 = vpop.f32.mrf.mxu0
    %v2301 = vadd.f32 0.0, %v2300
    %v2302 = vpop.f32.mrf.mxu0
    %v2303 = vadd.f32 0.0, %v2302
    %2304 = vmatmul.bf16.gmra.mxu0 %v1974
    %v2305 = vpop.f32.mrf.mxu0
    %v2306 = vadd.f32 0.0, %v2305
    %v2307 = vpop.f32.mrf.mxu0
    %v2308 = vadd.f32 0.0, %v2307
    %2309 = vmatmul.bf16.gmra.mxu0 %v1977
    %v2310 = vpop.f32.mrf.mxu0
    %v2311 = vadd.f32 0.0, %v2310
    %v2312 = vpop.f32.mrf.mxu0
    %v2313 = vadd.f32 0.0, %v2312
    %2314 = vmatmul.bf16.gmra.mxu0 %v1980
    %v2315 = vpop.f32.mrf.mxu0
    %v2316 = vadd.f32 0.0, %v2315
    %v2317 = vpop.f32.mrf.mxu0
    %v2318 = vadd.f32 0.0, %v2317
    %2319 = vmatmul.bf16.gmra.mxu0 %v1983
    %v2320 = vpop.f32.mrf.mxu0
    %v2321 = vadd.f32 0.0, %v2320
    %v2322 = vpop.f32.mrf.mxu0
    %v2323 = vadd.f32 0.0, %v2322
    %2324 = vmatmul.bf16.gmra.mxu0 %v1986
    %v2325 = vpop.f32.mrf.mxu0
    %v2326 = vadd.f32 0.0, %v2325
    %v2327 = vpop.f32.mrf.mxu0
    %v2328 = vadd.f32 0.0, %v2327
    %2329 = vmatmul.bf16.gmra.mxu0 %v1989
    %v2330 = vpop.f32.mrf.mxu0
    %v2331 = vadd.f32 0.0, %v2330
    %v2332 = vpop.f32.mrf.mxu0
    %v2333 = vadd.f32 0.0, %v2332
    %2334 = vmatmul.bf16.gmra.mxu0 %v1992
    %v2335 = vpop.f32.mrf.mxu0
    %v2336 = vadd.f32 0.0, %v2335
    %v2337 = vpop.f32.mrf.mxu0
    %v2338 = vadd.f32 0.0, %v2337
    %2339 = vmatmul.bf16.gmra.mxu0 %v1995
    %v2340 = vpop.f32.mrf.mxu0
    %v2341 = vadd.f32 0.0, %v2340
    %v2342 = vpop.f32.mrf.mxu0
    %v2343 = vadd.f32 0.0, %v2342
    %2344 = vmatmul.bf16.gmra.mxu0 %v1998
    %v2345 = vpop.f32.mrf.mxu0
    %v2346 = vadd.f32 0.0, %v2345
    %v2347 = vpop.f32.mrf.mxu0
    %v2348 = vadd.f32 0.0, %v2347
    %2349 = vmatmul.bf16.gmra.mxu0 %v2001
    %v2350 = vpop.f32.mrf.mxu0
    %v2351 = vadd.f32 0.0, %v2350
    %v2352 = vpop.f32.mrf.mxu0
    %v2353 = vadd.f32 0.0, %v2352
    %2354 = vmatmul.bf16.gmra.mxu0 %v2004
    %v2355 = vpop.f32.mrf.mxu0
    %v2356 = vadd.f32 0.0, %v2355
    %v2357 = vpop.f32.mrf.mxu0
    %v2358 = vadd.f32 0.0, %v2357
    %2359 = vmatmul.bf16.gmra.mxu0 %v2007
    %v2360 = vpop.f32.mrf.mxu0
    %v2361 = vadd.f32 0.0, %v2360
    %v2362 = vpop.f32.mrf.mxu0
    %v2363 = vadd.f32 0.0, %v2362
    %2364 = vdwg.mxu0
    %v2365 = vadd.f32 %v1315, %v2019
    %v2366 = vadd.f32 %v1404, %v2108
    %v2367 = vadd.f32 %v1493, %v2197
    %v2368 = vadd.f32 %v1582, %v2286
    %v2369 = vadd.f32 %v1317, %v2021
    %v2370 = vadd.f32 %v1406, %v2110
    %v2371 = vadd.f32 %v1495, %v2199
    %v2372 = vadd.f32 %v1584, %v2288
    %v2373 = vadd.f32 %v1320, %v2024
    %v2374 = vadd.f32 %v1409, %v2113
    %v2375 = vadd.f32 %v1498, %v2202
    %v2376 = vadd.f32 %v1587, %v2291
    %v2377 = vadd.f32 %v1322, %v2026
    %v2378 = vadd.f32 %v1411, %v2115
    %v2379 = vadd.f32 %v1500, %v2204
    %v2380 = vadd.f32 %v1589, %v2293
    %v2381 = vadd.f32 %v1325, %v2029
    %v2382 = vadd.f32 %v1414, %v2118
    %v2383 = vadd.f32 %v1503, %v2207
    %v2384 = vadd.f32 %v1592, %v2296
    %v2385 = vadd.f32 %v1327, %v2031
    %v2386 = vadd.f32 %v1416, %v2120
    %v2387 = vadd.f32 %v1505, %v2209
    %v2388 = vadd.f32 %v1594, %v2298
    %v2389 = vadd.f32 %v1330, %v2034
    %v2390 = vadd.f32 %v1419, %v2123
    %v2391 = vadd.f32 %v1508, %v2212
    %v2392 = vadd.f32 %v1597, %v2301
    %v2393 = vadd.f32 %v1332, %v2036
    %v2394 = vadd.f32 %v1421, %v2125
    %v2395 = vadd.f32 %v1510, %v2214
    %v2396 = vadd.f32 %v1599, %v2303
    %v2397 = vadd.f32 %v1335, %v2039
    %v2398 = vadd.f32 %v1424, %v2128
    %v2399 = vadd.f32 %v1513, %v2217
    %v2400 = vadd.f32 %v1602, %v2306
    %v2401 = vadd.f32 %v1337, %v2041
    %v2402 = vadd.f32 %v1426, %v2130
    %v2403 = vadd.f32 %v1515, %v2219
    %v2404 = vadd.f32 %v1604, %v2308
    %v2405 = vadd.f32 %v1340, %v2044
    %v2406 = vadd.f32 %v1429, %v2133
    %v2407 = vadd.f32 %v1518, %v2222
    %v2408 = vadd.f32 %v1607, %v2311
    %v2409 = vadd.f32 %v1342, %v2046
    %v2410 = vadd.f32 %v1431, %v2135
    %v2411 = vadd.f32 %v1520, %v2224
    %v2412 = vadd.f32 %v1609, %v2313
    %v2413 = vadd.f32 %v1345, %v2049
    %v2414 = vadd.f32 %v1434, %v2138
    %v2415 = vadd.f32 %v1523, %v2227
    %v2416 = vadd.f32 %v1612, %v2316
    %v2417 = vadd.f32 %v1347, %v2051
    %v2418 = vadd.f32 %v1436, %v2140
    %v2419 = vadd.f32 %v1525, %v2229
    %v2420 = vadd.f32 %v1614, %v2318
    %v2421 = vadd.f32 %v1350, %v2054
    %v2422 = vadd.f32 %v1439, %v2143
    %v2423 = vadd.f32 %v1528, %v2232
    %v2424 = vadd.f32 %v1617, %v2321
    %v2425 = vadd.f32 %v1352, %v2056
    %v2426 = vadd.f32 %v1441, %v2145
    %v2427 = vadd.f32 %v1530, %v2234
    %v2428 = vadd.f32 %v1619, %v2323
    %v2429 = vadd.f32 %v1355, %v2059
    %v2430 = vadd.f32 %v1444, %v2148
    %v2431 = vadd.f32 %v1533, %v2237
    %v2432 = vadd.f32 %v1622, %v2326
    %v2433 = vadd.f32 %v1357, %v2061
    %v2434 = vadd.f32 %v1446, %v2150
    %v2435 = vadd.f32 %v1535, %v2239
    %v2436 = vadd.f32 %v1624, %v2328
    %v2437 = vadd.f32 %v1360, %v2064
    %v2438 = vadd.f32 %v1449, %v2153
    %v2439 = vadd.f32 %v1538, %v2242
    %v2440 = vadd.f32 %v1627, %v2331
    %v2441 = vadd.f32 %v1362, %v2066
    %v2442 = vadd.f32 %v1451, %v2155
    %v2443 = vadd.f32 %v1540, %v2244
    %v2444 = vadd.f32 %v1629, %v2333
    %v2445 = vadd.f32 %v1365, %v2069
    %v2446 = vadd.f32 %v1454, %v2158
    %v2447 = vadd.f32 %v1543, %v2247
    %v2448 = vadd.f32 %v1632, %v2336
    %v2449 = vadd.f32 %v1367, %v2071
    %v2450 = vadd.f32 %v1456, %v2160
    %v2451 = vadd.f32 %v1545, %v2249
    %v2452 = vadd.f32 %v1634, %v2338
    %v2453 = vadd.f32 %v1370, %v2074
    %v2454 = vadd.f32 %v1459, %v2163
    %v2455 = vadd.f32 %v1548, %v2252
    %v2456 = vadd.f32 %v1637, %v2341
    %v2457 = vadd.f32 %v1372, %v2076
    %v2458 = vadd.f32 %v1461, %v2165
    %v2459 = vadd.f32 %v1550, %v2254
    %v2460 = vadd.f32 %v1639, %v2343
    %v2461 = vadd.f32 %v1375, %v2079
    %v2462 = vadd.f32 %v1464, %v2168
    %v2463 = vadd.f32 %v1553, %v2257
    %v2464 = vadd.f32 %v1642, %v2346
    %v2465 = vadd.f32 %v1377, %v2081
    %v2466 = vadd.f32 %v1466, %v2170
    %v2467 = vadd.f32 %v1555, %v2259
    %v2468 = vadd.f32 %v1644, %v2348
    %v2469 = vadd.f32 %v1380, %v2084
    %v2470 = vadd.f32 %v1469, %v2173
    %v2471 = vadd.f32 %v1558, %v2262
    %v2472 = vadd.f32 %v1647, %v2351
    %v2473 = vadd.f32 %v1382, %v2086
    %v2474 = vadd.f32 %v1471, %v2175
    %v2475 = vadd.f32 %v1560, %v2264
    %v2476 = vadd.f32 %v1649, %v2353
    %v2477 = vadd.f32 %v1385, %v2089
    %v2478 = vadd.f32 %v1474, %v2178
    %v2479 = vadd.f32 %v1563, %v2267
    %v2480 = vadd.f32 %v1652, %v2356
    %v2481 = vadd.f32 %v1387, %v2091
    %v2482 = vadd.f32 %v1476, %v2180
    %v2483 = vadd.f32 %v1565, %v2269
    %v2484 = vadd.f32 %v1654, %v2358
    %v2485 = vadd.f32 %v1390, %v2094
    %v2486 = vadd.f32 %v1479, %v2183
    %v2487 = vadd.f32 %v1568, %v2272
    %v2488 = vadd.f32 %v1657, %v2361
    %v2489 = vadd.f32 %v1392, %v2096
    %v2490 = vadd.f32 %v1481, %v2185
    %v2491 = vadd.f32 %v1570, %v2274
    %v2492 = vadd.f32 %v1659, %v2363
    %v2493 = vmax.f32 %v2365, 0.0
    %v2494 = vmax.f32 %v2366, 0.0
    %v2495 = vmax.f32 %v2367, 0.0
    %v2496 = vmax.f32 %v2368, 0.0
    %v2497 = vmax.f32 %v2369, 0.0
    %v2498 = vmax.f32 %v2370, 0.0
    %v2499 = vmax.f32 %v2371, 0.0
    %v2500 = vmax.f32 %v2372, 0.0
    %v2501 = vmax.f32 %v2373, 0.0
    %v2502 = vmax.f32 %v2374, 0.0
    %v2503 = vmax.f32 %v2375, 0.0
    %v2504 = vmax.f32 %v2376, 0.0
    %v2505 = vmax.f32 %v2377, 0.0
    %v2506 = vmax.f32 %v2378, 0.0
    %v2507 = vmax.f32 %v2379, 0.0
    %v2508 = vmax.f32 %v2380, 0.0
    %v2509 = vmax.f32 %v2381, 0.0
    %v2510 = vmax.f32 %v2382, 0.0
    %v2511 = vmax.f32 %v2383, 0.0
    %v2512 = vmax.f32 %v2384, 0.0
    %v2513 = vmax.f32 %v2385, 0.0
    %v2514 = vmax.f32 %v2386, 0.0
    %v2515 = vmax.f32 %v2387, 0.0
    %v2516 = vmax.f32 %v2388, 0.0
    %v2517 = vmax.f32 %v2389, 0.0
    %v2518 = vmax.f32 %v2390, 0.0
    %v2519 = vmax.f32 %v2391, 0.0
    %v2520 = vmax.f32 %v2392, 0.0
    %v2521 = vmax.f32 %v2393, 0.0
    %v2522 = vmax.f32 %v2394, 0.0
    %v2523 = vmax.f32 %v2395, 0.0
    %v2524 = vmax.f32 %v2396, 0.0
    %v2525 = vmax.f32 %v2397, 0.0
    %v2526 = vmax.f32 %v2398, 0.0
    %v2527 = vmax.f32 %v2399, 0.0
    %v2528 = vmax.f32 %v2400, 0.0
    %v2529 = vmax.f32 %v2401, 0.0
    %v2530 = vmax.f32 %v2402, 0.0
    %v2531 = vmax.f32 %v2403, 0.0
    %v2532 = vmax.f32 %v2404, 0.0
    %v2533 = vmax.f32 %v2405, 0.0
    %v2534 = vmax.f32 %v2406, 0.0
    %v2535 = vmax.f32 %v2407, 0.0
    %v2536 = vmax.f32 %v2408, 0.0
    %v2537 = vmax.f32 %v2409, 0.0
    %v2538 = vmax.f32 %v2410, 0.0
    %v2539 = vmax.f32 %v2411, 0.0
    %v2540 = vmax.f32 %v2412, 0.0
    %v2541 = vmax.f32 %v2413, 0.0
    %v2542 = vmax.f32 %v2414, 0.0
    %v2543 = vmax.f32 %v2415, 0.0
    %v2544 = vmax.f32 %v2416, 0.0
    %v2545 = vmax.f32 %v2417, 0.0
    %v2546 = vmax.f32 %v2418, 0.0
    %v2547 = vmax.f32 %v2419, 0.0
    %v2548 = vmax.f32 %v2420, 0.0
    %v2549 = vmax.f32 %v2421, 0.0
    %v2550 = vmax.f32 %v2422, 0.0
    %v2551 = vmax.f32 %v2423, 0.0
    %v2552 = vmax.f32 %v2424, 0.0
    %v2553 = vmax.f32 %v2425, 0.0
    %v2554 = vmax.f32 %v2426, 0.0
    %v2555 = vmax.f32 %v2427, 0.0
    %v2556 = vmax.f32 %v2428, 0.0
    %v2557 = vmax.f32 %v2429, 0.0
    %v2558 = vmax.f32 %v2430, 0.0
    %v2559 = vmax.f32 %v2431, 0.0
    %v2560 = vmax.f32 %v2432, 0.0
    %v2561 = vmax.f32 %v2433, 0.0
    %v2562 = vmax.f32 %v2434, 0.0
    %v2563 = vmax.f32 %v2435, 0.0
    %v2564 = vmax.f32 %v2436, 0.0
    %v2565 = vmax.f32 %v2437, 0.0
    %v2566 = vmax.f32 %v2438, 0.0
    %v2567 = vmax.f32 %v2439, 0.0
    %v2568 = vmax.f32 %v2440, 0.0
    %v2569 = vmax.f32 %v2441, 0.0
    %v2570 = vmax.f32 %v2442, 0.0
    %v2571 = vmax.f32 %v2443, 0.0
    %v2572 = vmax.f32 %v2444, 0.0
    %v2573 = vmax.f32 %v2445, 0.0
    %v2574 = vmax.f32 %v2446, 0.0
    %v2575 = vmax.f32 %v2447, 0.0
    %v2576 = vmax.f32 %v2448, 0.0
    %v2577 = vmax.f32 %v2449, 0.0
    %v2578 = vmax.f32 %v2450, 0.0
    %v2579 = vmax.f32 %v2451, 0.0
    %v2580 = vmax.f32 %v2452, 0.0
    %v2581 = vmax.f32 %v2453, 0.0
    %v2582 = vmax.f32 %v2454, 0.0
    %v2583 = vmax.f32 %v2455, 0.0
    %v2584 = vmax.f32 %v2456, 0.0
    %v2585 = vmax.f32 %v2457, 0.0
    %v2586 = vmax.f32 %v2458, 0.0
    %v2587 = vmax.f32 %v2459, 0.0
    %v2588 = vmax.f32 %v2460, 0.0
    %v2589 = vmax.f32 %v2461, 0.0
    %v2590 = vmax.f32 %v2462, 0.0
    %v2591 = vmax.f32 %v2463, 0.0
    %v2592 = vmax.f32 %v2464, 0.0
    %v2593 = vmax.f32 %v2465, 0.0
    %v2594 = vmax.f32 %v2466, 0.0
    %v2595 = vmax.f32 %v2467, 0.0
    %v2596 = vmax.f32 %v2468, 0.0
    %v2597 = vmax.f32 %v2469, 0.0
    %v2598 = vmax.f32 %v2470, 0.0
    %v2599 = vmax.f32 %v2471, 0.0
    %v2600 = vmax.f32 %v2472, 0.0
    %v2601 = vmax.f32 %v2473, 0.0
    %v2602 = vmax.f32 %v2474, 0.0
    %v2603 = vmax.f32 %v2475, 0.0
    %v2604 = vmax.f32 %v2476, 0.0
    %v2605 = vmax.f32 %v2477, 0.0
    %v2606 = vmax.f32 %v2478, 0.0
    %v2607 = vmax.f32 %v2479, 0.0
    %v2608 = vmax.f32 %v2480, 0.0
    %v2609 = vmax.f32 %v2481, 0.0
    %v2610 = vmax.f32 %v2482, 0.0
    %v2611 = vmax.f32 %v2483, 0.0
    %v2612 = vmax.f32 %v2484, 0.0
    %v2613 = vmax.f32 %v2485, 0.0
    %v2614 = vmax.f32 %v2486, 0.0
    %v2615 = vmax.f32 %v2487, 0.0
    %v2616 = vmax.f32 %v2488, 0.0
    %v2617 = vmax.f32 %v2489, 0.0
    %v2618 = vmax.f32 %v2490, 0.0
    %v2619 = vmax.f32 %v2491, 0.0
    %v2620 = vmax.f32 %v2492, 0.0
    %v2621 = vld [vmem:[#allocation5] sm:$0xff]
    %v2622 = vld [vmem:[#allocation5 + $0x8] sm:$0xff]
    %v2623 = vld [vmem:[#allocation5 + $0x10] sm:$0xff]
    %v2624 = vld [vmem:[#allocation5 + $0x18] sm:$0xff]
    %v2625 = vld [vmem:[#allocation5 + $0x20] sm:$0xff]
    %v2626 = vld [vmem:[#allocation5 + $0x28] sm:$0xff]
    %v2627 = vld [vmem:[#allocation5 + $0x30] sm:$0xff]
    %v2628 = vld [vmem:[#allocation5 + $0x38] sm:$0xff]
    %v2629 = vld [vmem:[#allocation5 + $0x40] sm:$0xff]
    %v2630 = vld [vmem:[#allocation5 + $0x48] sm:$0xff]
    %v2631 = vld [vmem:[#allocation5 + $0x50] sm:$0xff]
    %v2632 = vld [vmem:[#allocation5 + $0x58] sm:$0xff]
    %v2633 = vld [vmem:[#allocation5 + $0x60] sm:$0xff]
    %v2634 = vld [vmem:[#allocation5 + $0x68] sm:$0xff]
    %v2635 = vld [vmem:[#allocation5 + $0x70] sm:$0xff]
    %v2636 = vld [vmem:[#allocation5 + $0x78] sm:$0xff]
    %v2637 = vld [vmem:[#allocation5 + $0x80] sm:$0xff]
    %v2638 = vld [vmem:[#allocation5 + $0x88] sm:$0xff]
    %v2639 = vld [vmem:[#allocation5 + $0x90] sm:$0xff]
    %v2640 = vld [vmem:[#allocation5 + $0x98] sm:$0xff]
    %v2641 = vld [vmem:[#allocation5 + $0xa0] sm:$0xff]
    %v2642 = vld [vmem:[#allocation5 + $0xa8] sm:$0xff]
    %v2643 = vld [vmem:[#allocation5 + $0xb0] sm:$0xff]
    %v2644 = vld [vmem:[#allocation5 + $0xb8] sm:$0xff]
    %v2645 = vld [vmem:[#allocation5 + $0xc0] sm:$0xff]
    %v2646 = vld [vmem:[#allocation5 + $0xc8] sm:$0xff]
    %v2647 = vld [vmem:[#allocation5 + $0xd0] sm:$0xff]
    %v2648 = vld [vmem:[#allocation5 + $0xd8] sm:$0xff]
    %v2649 = vld [vmem:[#allocation5 + $0xe0] sm:$0xff]
    %v2650 = vld [vmem:[#allocation5 + $0xe8] sm:$0xff]
    %v2651 = vld [vmem:[#allocation5 + $0xf0] sm:$0xff]
    %v2652 = vld [vmem:[#allocation5 + $0xf8] sm:$0xff]
    %v2653 = vld [vmem:[#allocation5 + $0x100] sm:$0xff]
    %v2654 = vld [vmem:[#allocation5 + $0x108] sm:$0xff]
    %v2655 = vld [vmem:[#allocation5 + $0x110] sm:$0xff]
    %v2656 = vld [vmem:[#allocation5 + $0x118] sm:$0xff]
    %v2657 = vld [vmem:[#allocation5 + $0x120] sm:$0xff]
    %v2658 = vld [vmem:[#allocation5 + $0x128] sm:$0xff]
    %v2659 = vld [vmem:[#allocation5 + $0x130] sm:$0xff]
    %v2660 = vld [vmem:[#allocation5 + $0x138] sm:$0xff]
    %v2661 = vld [vmem:[#allocation5 + $0x140] sm:$0xff]
    %v2662 = vld [vmem:[#allocation5 + $0x148] sm:$0xff]
    %v2663 = vld [vmem:[#allocation5 + $0x150] sm:$0xff]
    %v2664 = vld [vmem:[#allocation5 + $0x158] sm:$0xff]
    %v2665 = vld [vmem:[#allocation5 + $0x160] sm:$0xff]
    %v2666 = vld [vmem:[#allocation5 + $0x168] sm:$0xff]
    %v2667 = vld [vmem:[#allocation5 + $0x170] sm:$0xff]
    %v2668 = vld [vmem:[#allocation5 + $0x178] sm:$0xff]
    %v2669 = vld [vmem:[#allocation5 + $0x180] sm:$0xff]
    %v2670 = vld [vmem:[#allocation5 + $0x188] sm:$0xff]
    %v2671 = vld [vmem:[#allocation5 + $0x190] sm:$0xff]
    %v2672 = vld [vmem:[#allocation5 + $0x198] sm:$0xff]
    %v2673 = vld [vmem:[#allocation5 + $0x1a0] sm:$0xff]
    %v2674 = vld [vmem:[#allocation5 + $0x1a8] sm:$0xff]
    %v2675 = vld [vmem:[#allocation5 + $0x1b0] sm:$0xff]
    %v2676 = vld [vmem:[#allocation5 + $0x1b8] sm:$0xff]
    %v2677 = vld [vmem:[#allocation5 + $0x1c0] sm:$0xff]
    %v2678 = vld [vmem:[#allocation5 + $0x1c8] sm:$0xff]
    %v2679 = vld [vmem:[#allocation5 + $0x1d0] sm:$0xff]
    %v2680 = vld [vmem:[#allocation5 + $0x1d8] sm:$0xff]
    %v2681 = vld [vmem:[#allocation5 + $0x1e0] sm:$0xff]
    %v2682 = vld [vmem:[#allocation5 + $0x1e8] sm:$0xff]
    %v2683 = vld [vmem:[#allocation5 + $0x1f0] sm:$0xff]
    %v2684 = vld [vmem:[#allocation5 + $0x1f8] sm:$0xff]
    %2685 = vmatpush.msra.mxu0 %v2636
    %2686 = vmatpush.msra.mxu0 %v2635
    %2687 = vmatpush.msra.mxu0 %v2634
    %2688 = vmatpush.msra.mxu0 %v2633
    %2689 = vmatpush.msra.mxu0 %v2632
    %2690 = vmatpush.msra.mxu0 %v2631
    %2691 = vmatpush.msra.mxu0 %v2630
    %2692 = vmatpush.msra.mxu0 %v2629
    %2693 = vmatpush.msra.mxu0 %v2628
    %2694 = vmatpush.msra.mxu0 %v2627
    %2695 = vmatpush.msra.mxu0 %v2626
    %2696 = vmatpush.msra.mxu0 %v2625
    %2697 = vmatpush.msra.mxu0 %v2624
    %2698 = vmatpush.msra.mxu0 %v2623
    %2699 = vmatpush.msra.mxu0 %v2622
    %2700 = vmatpush.msra.mxu0 %v2621
    %2701 = vmatmul.f32.gmra.mxu0 %v2493
    %v2702 = vpop.f32.mrf.mxu0
    %v2703 = vadd.f32 0.0, %v2702
    %2704 = vmatmul.f32.gmra.mxu0 %v2497
    %v2705 = vpop.f32.mrf.mxu0
    %v2706 = vadd.f32 0.0, %v2705
    %2707 = vmatmul.f32.gmra.mxu0 %v2501
    %v2708 = vpop.f32.mrf.mxu0
    %v2709 = vadd.f32 0.0, %v2708
    %2710 = vmatmul.f32.gmra.mxu0 %v2505
    %v2711 = vpop.f32.mrf.mxu0
    %v2712 = vadd.f32 0.0, %v2711
    %2713 = vmatmul.f32.gmra.mxu0 %v2509
    %v2714 = vpop.f32.mrf.mxu0
    %v2715 = vadd.f32 0.0, %v2714
    %2716 = vmatmul.f32.gmra.mxu0 %v2513
    %v2717 = vpop.f32.mrf.mxu0
    %v2718 = vadd.f32 0.0, %v2717
    %2719 = vmatmul.f32.gmra.mxu0 %v2517
    %v2720 = vpop.f32.mrf.mxu0
    %v2721 = vadd.f32 0.0, %v2720
    %2722 = vmatmul.f32.gmra.mxu0 %v2521
    %v2723 = vpop.f32.mrf.mxu0
    %v2724 = vadd.f32 0.0, %v2723
    %2725 = vmatmul.f32.gmra.mxu0 %v2525
    %v2726 = vpop.f32.mrf.mxu0
    %v2727 = vadd.f32 0.0, %v2726
    %2728 = vmatmul.f32.gmra.mxu0 %v2529
    %v2729 = vpop.f32.mrf.mxu0
    %v2730 = vadd.f32 0.0, %v2729
    %2731 = vmatmul.f32.gmra.mxu0 %v2533
    %v2732 = vpop.f32.mrf.mxu0
    %v2733 = vadd.f32 0.0, %v2732
    %2734 = vmatmul.f32.gmra.mxu0 %v2537
    %v2735 = vpop.f32.mrf.mxu0
    %v2736 = vadd.f32 0.0, %v2735
    %2737 = vmatmul.f32.gmra.mxu0 %v2541
    %v2738 = vpop.f32.mrf.mxu0
    %v2739 = vadd.f32 0.0, %v2738
    %2740 = vmatmul.f32.gmra.mxu0 %v2545
    %v2741 = vpop.f32.mrf.mxu0
    %v2742 = vadd.f32 0.0, %v2741
    %2743 = vmatmul.f32.gmra.mxu0 %v2549
    %v2744 = vpop.f32.mrf.mxu0
    %v2745 = vadd.f32 0.0, %v2744
    %2746 = vmatmul.f32.gmra.mxu0 %v2553
    %v2747 = vpop.f32.mrf.mxu0
    %v2748 = vadd.f32 0.0, %v2747
    %2749 = vmatmul.f32.gmra.mxu0 %v2557
    %v2750 = vpop.f32.mrf.mxu0
    %v2751 = vadd.f32 0.0, %v2750
    %2752 = vmatmul.f32.gmra.mxu0 %v2561
    %v2753 = vpop.f32.mrf.mxu0
    %v2754 = vadd.f32 0.0, %v2753
    %2755 = vmatmul.f32.gmra.mxu0 %v2565
    %v2756 = vpop.f32.mrf.mxu0
    %v2757 = vadd.f32 0.0, %v2756
    %2758 = vmatmul.f32.gmra.mxu0 %v2569
    %v2759 = vpop.f32.mrf.mxu0
    %v2760 = vadd.f32 0.0, %v2759
    %2761 = vmatmul.f32.gmra.mxu0 %v2573
    %v2762 = vpop.f32.mrf.mxu0
    %v2763 = vadd.f32 0.0, %v2762
    %2764 = vmatmul.f32.gmra.mxu0 %v2577
    %v2765 = vpop.f32.mrf.mxu0
    %v2766 = vadd.f32 0.0, %v2765
    %2767 = vmatmul.f32.gmra.mxu0 %v2581
    %v2768 = vpop.f32.mrf.mxu0
    %v2769 = vadd.f32 0.0, %v2768
    %2770 = vmatmul.f32.gmra.mxu0 %v2585
    %v2771 = vpop.f32.mrf.mxu0
    %v2772 = vadd.f32 0.0, %v2771
    %2773 = vmatmul.f32.gmra.mxu0 %v2589
    %v2774 = vpop.f32.mrf.mxu0
    %v2775 = vadd.f32 0.0, %v2774
    %2776 = vmatmul.f32.gmra.mxu0 %v2593
    %v2777 = vpop.f32.mrf.mxu0
    %v2778 = vadd.f32 0.0, %v2777
    %2779 = vmatmul.f32.gmra.mxu0 %v2597
    %v2780 = vpop.f32.mrf.mxu0
    %v2781 = vadd.f32 0.0, %v2780
    %2782 = vmatmul.f32.gmra.mxu0 %v2601
    %v2783 = vpop.f32.mrf.mxu0
    %v2784 = vadd.f32 0.0, %v2783
    %2785 = vmatmul.f32.gmra.mxu0 %v2605
    %v2786 = vpop.f32.mrf.mxu0
    %v2787 = vadd.f32 0.0, %v2786
    %2788 = vmatmul.f32.gmra.mxu0 %v2609
    %v2789 = vpop.f32.mrf.mxu0
    %v2790 = vadd.f32 0.0, %v2789
    %2791 = vmatmul.f32.gmra.mxu0 %v2613
    %v2792 = vpop.f32.mrf.mxu0
    %v2793 = vadd.f32 0.0, %v2792
    %2794 = vmatmul.f32.gmra.mxu0 %v2617
    %v2795 = vpop.f32.mrf.mxu0
    %v2796 = vadd.f32 0.0, %v2795
    %2797 = vdwg.mxu0
    %2798 = vmatpush.msra.mxu0 %v2652
    %2799 = vmatpush.msra.mxu0 %v2651
    %2800 = vmatpush.msra.mxu0 %v2650
    %2801 = vmatpush.msra.mxu0 %v2649
    %2802 = vmatpush.msra.mxu0 %v2648
    %2803 = vmatpush.msra.mxu0 %v2647
    %2804 = vmatpush.msra.mxu0 %v2646
    %2805 = vmatpush.msra.mxu0 %v2645
    %2806 = vmatpush.msra.mxu0 %v2644
    %2807 = vmatpush.msra.mxu0 %v2643
    %2808 = vmatpush.msra.mxu0 %v2642
    %2809 = vmatpush.msra.mxu0 %v2641
    %2810 = vmatpush.msra.mxu0 %v2640
    %2811 = vmatpush.msra.mxu0 %v2639
    %2812 = vmatpush.msra.mxu0 %v2638
    %2813 = vmatpush.msra.mxu0 %v2637
    %2814 = vmatmul.f32.gmra.mxu0 %v2494
    %v2815 = vpop.f32.mrf.mxu0
    %v2816 = vadd.f32 %v2703, %v2815
    %2817 = vmatmul.f32.gmra.mxu0 %v2498
    %v2818 = vpop.f32.mrf.mxu0
    %v2819 = vadd.f32 %v2706, %v2818
    %2820 = vmatmul.f32.gmra.mxu0 %v2502
    %v2821 = vpop.f32.mrf.mxu0
    %v2822 = vadd.f32 %v2709, %v2821
    %2823 = vmatmul.f32.gmra.mxu0 %v2506
    %v2824 = vpop.f32.mrf.mxu0
    %v2825 = vadd.f32 %v2712, %v2824
    %2826 = vmatmul.f32.gmra.mxu0 %v2510
    %v2827 = vpop.f32.mrf.mxu0
    %v2828 = vadd.f32 %v2715, %v2827
    %2829 = vmatmul.f32.gmra.mxu0 %v2514
    %v2830 = vpop.f32.mrf.mxu0
    %v2831 = vadd.f32 %v2718, %v2830
    %2832 = vmatmul.f32.gmra.mxu0 %v2518
    %v2833 = vpop.f32.mrf.mxu0
    %v2834 = vadd.f32 %v2721, %v2833
    %2835 = vmatmul.f32.gmra.mxu0 %v2522
    %v2836 = vpop.f32.mrf.mxu0
    %v2837 = vadd.f32 %v2724, %v2836
    %2838 = vmatmul.f32.gmra.mxu0 %v2526
    %v2839 = vpop.f32.mrf.mxu0
    %v2840 = vadd.f32 %v2727, %v2839
    %2841 = vmatmul.f32.gmra.mxu0 %v2530
    %v2842 = vpop.f32.mrf.mxu0
    %v2843 = vadd.f32 %v2730, %v2842
    %2844 = vmatmul.f32.gmra.mxu0 %v2534
    %v2845 = vpop.f32.mrf.mxu0
    %v2846 = vadd.f32 %v2733, %v2845
    %2847 = vmatmul.f32.gmra.mxu0 %v2538
    %v2848 = vpop.f32.mrf.mxu0
    %v2849 = vadd.f32 %v2736, %v2848
    %2850 = vmatmul.f32.gmra.mxu0 %v2542
    %v2851 = vpop.f32.mrf.mxu0
    %v2852 = vadd.f32 %v2739, %v2851
    %2853 = vmatmul.f32.gmra.mxu0 %v2546
    %v2854 = vpop.f32.mrf.mxu0
    %v2855 = vadd.f32 %v2742, %v2854
    %2856 = vmatmul.f32.gmra.mxu0 %v2550
    %v2857 = vpop.f32.mrf.mxu0
    %v2858 = vadd.f32 %v2745, %v2857
    %2859 = vmatmul.f32.gmra.mxu0 %v2554
    %v2860 = vpop.f32.mrf.mxu0
    %v2861 = vadd.f32 %v2748, %v2860
    %2862 = vmatmul.f32.gmra.mxu0 %v2558
    %v2863 = vpop.f32.mrf.mxu0
    %v2864 = vadd.f32 %v2751, %v2863
    %2865 = vmatmul.f32.gmra.mxu0 %v2562
    %v2866 = vpop.f32.mrf.mxu0
    %v2867 = vadd.f32 %v2754, %v2866
    %2868 = vmatmul.f32.gmra.mxu0 %v2566
    %v2869 = vpop.f32.mrf.mxu0
    %v2870 = vadd.f32 %v2757, %v2869
    %2871 = vmatmul.f32.gmra.mxu0 %v2570
    %v2872 = vpop.f32.mrf.mxu0
    %v2873 = vadd.f32 %v2760, %v2872
    %2874 = vmatmul.f32.gmra.mxu0 %v2574
    %v2875 = vpop.f32.mrf.mxu0
    %v2876 = vadd.f32 %v2763, %v2875
    %2877 = vmatmul.f32.gmra.mxu0 %v2578
    %v2878 = vpop.f32.mrf.mxu0
    %v2879 = vadd.f32 %v2766, %v2878
    %2880 = vmatmul.f32.gmra.mxu0 %v2582
    %v2881 = vpop.f32.mrf.mxu0
    %v2882 = vadd.f32 %v2769, %v2881
    %2883 = vmatmul.f32.gmra.mxu0 %v2586
    %v2884 = vpop.f32.mrf.mxu0
    %v2885 = vadd.f32 %v2772, %v2884
    %2886 = vmatmul.f32.gmra.mxu0 %v2590
    %v2887 = vpop.f32.mrf.mxu0
    %v2888 = vadd.f32 %v2775, %v2887
    %2889 = vmatmul.f32.gmra.mxu0 %v2594
    %v2890 = vpop.f32.mrf.mxu0
    %v2891 = vadd.f32 %v2778, %v2890
    %2892 = vmatmul.f32.gmra.mxu0 %v2598
    %v2893 = vpop.f32.mrf.mxu0
    %v2894 = vadd.f32 %v2781, %v2893
    %2895 = vmatmul.f32.gmra.mxu0 %v2602
    %v2896 = vpop.f32.mrf.mxu0
    %v2897 = vadd.f32 %v2784, %v2896
    %2898 = vmatmul.f32.gmra.mxu0 %v2606
    %v2899 = vpop.f32.mrf.mxu0
    %v2900 = vadd.f32 %v2787, %v2899
    %2901 = vmatmul.f32.gmra.mxu0 %v2610
    %v2902 = vpop.f32.mrf.mxu0
    %v2903 = vadd.f32 %v2790, %v2902
    %2904 = vmatmul.f32.gmra.mxu0 %v2614
    %v2905 = vpop.f32.mrf.mxu0
    %v2906 = vadd.f32 %v2793, %v2905
    %2907 = vmatmul.f32.gmra.mxu0 %v2618
    %v2908 = vpop.f32.mrf.mxu0
    %v2909 = vadd.f32 %v2796, %v2908
    %2910 = vdwg.mxu0
    %2911 = vmatpush.msra.mxu0 %v2668
    %2912 = vmatpush.msra.mxu0 %v2667
    %2913 = vmatpush.msra.mxu0 %v2666
    %2914 = vmatpush.msra.mxu0 %v2665
    %2915 = vmatpush.msra.mxu0 %v2664
    %2916 = vmatpush.msra.mxu0 %v2663
    %2917 = vmatpush.msra.mxu0 %v2662
    %2918 = vmatpush.msra.mxu0 %v2661
    %2919 = vmatpush.msra.mxu0 %v2660
    %2920 = vmatpush.msra.mxu0 %v2659
    %2921 = vmatpush.msra.mxu0 %v2658
    %2922 = vmatpush.msra.mxu0 %v2657
    %2923 = vmatpush.msra.mxu0 %v2656
    %2924 = vmatpush.msra.mxu0 %v2655
    %2925 = vmatpush.msra.mxu0 %v2654
    %2926 = vmatpush.msra.mxu0 %v2653
    %2927 = vmatmul.f32.gmra.mxu0 %v2495
    %v2928 = vpop.f32.mrf.mxu0
    %v2929 = vadd.f32 %v2816, %v2928
    %2930 = vmatmul.f32.gmra.mxu0 %v2499
    %v2931 = vpop.f32.mrf.mxu0
    %v2932 = vadd.f32 %v2819, %v2931
    %2933 = vmatmul.f32.gmra.mxu0 %v2503
    %v2934 = vpop.f32.mrf.mxu0
    %v2935 = vadd.f32 %v2822, %v2934
    %2936 = vmatmul.f32.gmra.mxu0 %v2507
    %v2937 = vpop.f32.mrf.mxu0
    %v2938 = vadd.f32 %v2825, %v2937
    %2939 = vmatmul.f32.gmra.mxu0 %v2511
    %v2940 = vpop.f32.mrf.mxu0
    %v2941 = vadd.f32 %v2828, %v2940
    %2942 = vmatmul.f32.gmra.mxu0 %v2515
    %v2943 = vpop.f32.mrf.mxu0
    %v2944 = vadd.f32 %v2831, %v2943
    %2945 = vmatmul.f32.gmra.mxu0 %v2519
    %v2946 = vpop.f32.mrf.mxu0
    %v2947 = vadd.f32 %v2834, %v2946
    %2948 = vmatmul.f32.gmra.mxu0 %v2523
    %v2949 = vpop.f32.mrf.mxu0
    %v2950 = vadd.f32 %v2837, %v2949
    %2951 = vmatmul.f32.gmra.mxu0 %v2527
    %v2952 = vpop.f32.mrf.mxu0
    %v2953 = vadd.f32 %v2840, %v2952
    %2954 = vmatmul.f32.gmra.mxu0 %v2531
    %v2955 = vpop.f32.mrf.mxu0
    %v2956 = vadd.f32 %v2843, %v2955
    %2957 = vmatmul.f32.gmra.mxu0 %v2535
    %v2958 = vpop.f32.mrf.mxu0
    %v2959 = vadd.f32 %v2846, %v2958
    %2960 = vmatmul.f32.gmra.mxu0 %v2539
    %v2961 = vpop.f32.mrf.mxu0
    %v2962 = vadd.f32 %v2849, %v2961
    %2963 = vmatmul.f32.gmra.mxu0 %v2543
    %v2964 = vpop.f32.mrf.mxu0
    %v2965 = vadd.f32 %v2852, %v2964
    %2966 = vmatmul.f32.gmra.mxu0 %v2547
    %v2967 = vpop.f32.mrf.mxu0
    %v2968 = vadd.f32 %v2855, %v2967
    %2969 = vmatmul.f32.gmra.mxu0 %v2551
    %v2970 = vpop.f32.mrf.mxu0
    %v2971 = vadd.f32 %v2858, %v2970
    %2972 = vmatmul.f32.gmra.mxu0 %v2555
    %v2973 = vpop.f32.mrf.mxu0
    %v2974 = vadd.f32 %v2861, %v2973
    %2975 = vmatmul.f32.gmra.mxu0 %v2559
    %v2976 = vpop.f32.mrf.mxu0
    %v2977 = vadd.f32 %v2864, %v2976
    %2978 = vmatmul.f32.gmra.mxu0 %v2563
    %v2979 = vpop.f32.mrf.mxu0
    %v2980 = vadd.f32 %v2867, %v2979
    %2981 = vmatmul.f32.gmra.mxu0 %v2567
    %v2982 = vpop.f32.mrf.mxu0
    %v2983 = vadd.f32 %v2870, %v2982
    %2984 = vmatmul.f32.gmra.mxu0 %v2571
    %v2985 = vpop.f32.mrf.mxu0
    %v2986 = vadd.f32 %v2873, %v2985
    %2987 = vmatmul.f32.gmra.mxu0 %v2575
    %v2988 = vpop.f32.mrf.mxu0
    %v2989 = vadd.f32 %v2876, %v2988
    %2990 = vmatmul.f32.gmra.mxu0 %v2579
    %v2991 = vpop.f32.mrf.mxu0
    %v2992 = vadd.f32 %v2879, %v2991
    %2993 = vmatmul.f32.gmra.mxu0 %v2583
    %v2994 = vpop.f32.mrf.mxu0
    %v2995 = vadd.f32 %v2882, %v2994
    %2996 = vmatmul.f32.gmra.mxu0 %v2587
    %v2997 = vpop.f32.mrf.mxu0
    %v2998 = vadd.f32 %v2885, %v2997
    %2999 = vmatmul.f32.gmra.mxu0 %v2591
    %v3000 = vpop.f32.mrf.mxu0
    %v3001 = vadd.f32 %v2888, %v3000
    %3002 = vmatmul.f32.gmra.mxu0 %v2595
    %v3003 = vpop.f32.mrf.mxu0
    %v3004 = vadd.f32 %v2891, %v3003
    %3005 = vmatmul.f32.gmra.mxu0 %v2599
    %v3006 = vpop.f32.mrf.mxu0
    %v3007 = vadd.f32 %v2894, %v3006
    %3008 = vmatmul.f32.gmra.mxu0 %v2603
    %v3009 = vpop.f32.mrf.mxu0
    %v3010 = vadd.f32 %v2897, %v3009
    %3011 = vmatmul.f32.gmra.mxu0 %v2607
    %v3012 = vpop.f32.mrf.mxu0
    %v3013 = vadd.f32 %v2900, %v3012
    %3014 = vmatmul.f32.gmra.mxu0 %v2611
    %v3015 = vpop.f32.mrf.mxu0
    %v3016 = vadd.f32 %v2903, %v3015
    %3017 = vmatmul.f32.gmra.mxu0 %v2615
    %v3018 = vpop.f32.mrf.mxu0
    %v3019 = vadd.f32 %v2906, %v3018
    %3020 = vmatmul.f32.gmra.mxu0 %v2619
    %v3021 = vpop.f32.mrf.mxu0
    %v3022 = vadd.f32 %v2909, %v3021
    %3023 = vdwg.mxu0
    %3024 = vmatpush.msra.mxu0 %v2684
    %3025 = vmatpush.msra.mxu0 %v2683
    %3026 = vmatpush.msra.mxu0 %v2682
    %3027 = vmatpush.msra.mxu0 %v2681
    %3028 = vmatpush.msra.mxu0 %v2680
    %3029 = vmatpush.msra.mxu0 %v2679
    %3030 = vmatpush.msra.mxu0 %v2678
    %3031 = vmatpush.msra.mxu0 %v2677
    %3032 = vmatpush.msra.mxu0 %v2676
    %3033 = vmatpush.msra.mxu0 %v2675
    %3034 = vmatpush.msra.mxu0 %v2674
    %3035 = vmatpush.msra.mxu0 %v2673
    %3036 = vmatpush.msra.mxu0 %v2672
    %3037 = vmatpush.msra.mxu0 %v2671
    %3038 = vmatpush.msra.mxu0 %v2670
    %3039 = vmatpush.msra.mxu0 %v2669
    %3040 = vmatmul.f32.gmra.mxu0 %v2496
    %v3041 = vpop.f32.mrf.mxu0
    %v3042 = vadd.f32 %v2929, %v3041
    %3043 = vmatmul.f32.gmra.mxu0 %v2500
    %v3044 = vpop.f32.mrf.mxu0
    %v3045 = vadd.f32 %v2932, %v3044
    %3046 = vmatmul.f32.gmra.mxu0 %v2504
    %v3047 = vpop.f32.mrf.mxu0
    %v3048 = vadd.f32 %v2935, %v3047
    %3049 = vmatmul.f32.gmra.mxu0 %v2508
    %v3050 = vpop.f32.mrf.mxu0
    %v3051 = vadd.f32 %v2938, %v3050
    %3052 = vmatmul.f32.gmra.mxu0 %v2512
    %v3053 = vpop.f32.mrf.mxu0
    %v3054 = vadd.f32 %v2941, %v3053
    %3055 = vmatmul.f32.gmra.mxu0 %v2516
    %v3056 = vpop.f32.mrf.mxu0
    %v3057 = vadd.f32 %v2944, %v3056
    %3058 = vmatmul.f32.gmra.mxu0 %v2520
    %v3059 = vpop.f32.mrf.mxu0
    %v3060 = vadd.f32 %v2947, %v3059
    %3061 = vmatmul.f32.gmra.mxu0 %v2524
    %v3062 = vpop.f32.mrf.mxu0
    %v3063 = vadd.f32 %v2950, %v3062
    %3064 = vmatmul.f32.gmra.mxu0 %v2528
    %v3065 = vpop.f32.mrf.mxu0
    %v3066 = vadd.f32 %v2953, %v3065
    %3067 = vmatmul.f32.gmra.mxu0 %v2532
    %v3068 = vpop.f32.mrf.mxu0
    %v3069 = vadd.f32 %v2956, %v3068
    %3070 = vmatmul.f32.gmra.mxu0 %v2536
    %v3071 = vpop.f32.mrf.mxu0
    %v3072 = vadd.f32 %v2959, %v3071
    %3073 = vmatmul.f32.gmra.mxu0 %v2540
    %v3074 = vpop.f32.mrf.mxu0
    %v3075 = vadd.f32 %v2962, %v3074
    %3076 = vmatmul.f32.gmra.mxu0 %v2544
    %v3077 = vpop.f32.mrf.mxu0
    %v3078 = vadd.f32 %v2965, %v3077
    %3079 = vmatmul.f32.gmra.mxu0 %v2548
    %v3080 = vpop.f32.mrf.mxu0
    %v3081 = vadd.f32 %v2968, %v3080
    %3082 = vmatmul.f32.gmra.mxu0 %v2552
    %v3083 = vpop.f32.mrf.mxu0
    %v3084 = vadd.f32 %v2971, %v3083
    %3085 = vmatmul.f32.gmra.mxu0 %v2556
    %v3086 = vpop.f32.mrf.mxu0
    %v3087 = vadd.f32 %v2974, %v3086
    %3088 = vmatmul.f32.gmra.mxu0 %v2560
    %v3089 = vpop.f32.mrf.mxu0
    %v3090 = vadd.f32 %v2977, %v3089
    %3091 = vmatmul.f32.gmra.mxu0 %v2564
    %v3092 = vpop.f32.mrf.mxu0
    %v3093 = vadd.f32 %v2980, %v3092
    %3094 = vmatmul.f32.gmra.mxu0 %v2568
    %v3095 = vpop.f32.mrf.mxu0
    %v3096 = vadd.f32 %v2983, %v3095
    %3097 = vmatmul.f32.gmra.mxu0 %v2572
    %v3098 = vpop.f32.mrf.mxu0
    %v3099 = vadd.f32 %v2986, %v3098
    %3100 = vmatmul.f32.gmra.mxu0 %v2576
    %v3101 = vpop.f32.mrf.mxu0
    %v3102 = vadd.f32 %v2989, %v3101
    %3103 = vmatmul.f32.gmra.mxu0 %v2580
    %v3104 = vpop.f32.mrf.mxu0
    %v3105 = vadd.f32 %v2992, %v3104
    %3106 = vmatmul.f32.gmra.mxu0 %v2584
    %v3107 = vpop.f32.mrf.mxu0
    %v3108 = vadd.f32 %v2995, %v3107
    %3109 = vmatmul.f32.gmra.mxu0 %v2588
    %v3110 = vpop.f32.mrf.mxu0
    %v3111 = vadd.f32 %v2998, %v3110
    %3112 = vmatmul.f32.gmra.mxu0 %v2592
    %v3113 = vpop.f32.mrf.mxu0
    %v3114 = vadd.f32 %v3001, %v3113
    %3115 = vmatmul.f32.gmra.mxu0 %v2596
    %v3116 = vpop.f32.mrf.mxu0
    %v3117 = vadd.f32 %v3004, %v3116
    %3118 = vmatmul.f32.gmra.mxu0 %v2600
    %v3119 = vpop.f32.mrf.mxu0
    %v3120 = vadd.f32 %v3007, %v3119
    %3121 = vmatmul.f32.gmra.mxu0 %v2604
    %v3122 = vpop.f32.mrf.mxu0
    %v3123 = vadd.f32 %v3010, %v3122
    %3124 = vmatmul.f32.gmra.mxu0 %v2608
    %v3125 = vpop.f32.mrf.mxu0
    %v3126 = vadd.f32 %v3013, %v3125
    %3127 = vmatmul.f32.gmra.mxu0 %v2612
    %v3128 = vpop.f32.mrf.mxu0
    %v3129 = vadd.f32 %v3016, %v3128
    %3130 = vmatmul.f32.gmra.mxu0 %v2616
    %v3131 = vpop.f32.mrf.mxu0
    %v3132 = vadd.f32 %v3019, %v3131
    %3133 = vmatmul.f32.gmra.mxu0 %v2620
    %v3134 = vpop.f32.mrf.mxu0
    %v3135 = vadd.f32 %v3022, %v3134
    %3136 = vdwg.mxu0
    %v3137 = vadd.f32 %v3042, %v3045
    %v3138 = vrot.slane %v3137, 4
    %v3139 = vadd.f32 %v3137, %v3138
    %v3140 = vrot.slane %v3139, 2
    %v3141 = vadd.f32 %v3139, %v3140
    %v3142 = vrot.slane %v3141, 1
    %v3143 = vadd.f32 %v3141, %v3142
    %v3144 = vadd.f32 %v3048, %v3051
    %v3145 = vrot.slane %v3144, 4
    %v3146 = vadd.f32 %v3144, %v3145
    %v3147 = vrot.slane %v3146, 2
    %v3148 = vadd.f32 %v3146, %v3147
    %v3149 = vrot.slane %v3148, 1
    %v3150 = vadd.f32 %v3148, %v3149
    %v3151 = vadd.f32 %v3054, %v3057
    %v3152 = vrot.slane %v3151, 4
    %v3153 = vadd.f32 %v3151, %v3152
    %v3154 = vrot.slane %v3153, 2
    %v3155 = vadd.f32 %v3153, %v3154
    %v3156 = vrot.slane %v3155, 1
    %v3157 = vadd.f32 %v3155, %v3156
    %v3158 = vadd.f32 %v3060, %v3063
    %v3159 = vrot.slane %v3158, 4
    %v3160 = vadd.f32 %v3158, %v3159
    %v3161 = vrot.slane %v3160, 2
    %v3162 = vadd.f32 %v3160, %v3161
    %v3163 = vrot.slane %v3162, 1
    %v3164 = vadd.f32 %v3162, %v3163
    %v3165 = vadd.f32 %v3066, %v3069
    %v3166 = vrot.slane %v3165, 4
    %v3167 = vadd.f32 %v3165, %v3166
    %v3168 = vrot.slane %v3167, 2
    %v3169 = vadd.f32 %v3167, %v3168
    %v3170 = vrot.slane %v3169, 1
    %v3171 = vadd.f32 %v3169, %v3170
    %v3172 = vadd.f32 %v3072, %v3075
    %v3173 = vrot.slane %v3172, 4
    %v3174 = vadd.f32 %v3172, %v3173
    %v3175 = vrot.slane %v3174, 2
    %v3176 = vadd.f32 %v3174, %v3175
    %v3177 = vrot.slane %v3176, 1
    %v3178 = vadd.f32 %v3176, %v3177
    %v3179 = vadd.f32 %v3078, %v3081
    %v3180 = vrot.slane %v3179, 4
    %v3181 = vadd.f32 %v3179, %v3180
    %v3182 = vrot.slane %v3181, 2
    %v3183 = vadd.f32 %v3181, %v3182
    %v3184 = vrot.slane %v3183, 1
    %v3185 = vadd.f32 %v3183, %v3184
    %v3186 = vadd.f32 %v3084, %v3087
    %v3187 = vrot.slane %v3186, 4
    %v3188 = vadd.f32 %v3186, %v3187
    %v3189 = vrot.slane %v3188, 2
    %v3190 = vadd.f32 %v3188, %v3189
    %v3191 = vrot.slane %v3190, 1
    %v3192 = vadd.f32 %v3190, %v3191
    %v3193 = vadd.f32 %v3090, %v3093
    %v3194 = vrot.slane %v3193, 4
    %v3195 = vadd.f32 %v3193, %v3194
    %v3196 = vrot.slane %v3195, 2
    %v3197 = vadd.f32 %v3195, %v3196
    %v3198 = vrot.slane %v3197, 1
    %v3199 = vadd.f32 %v3197, %v3198
    %v3200 = vadd.f32 %v3096, %v3099
    %v3201 = vrot.slane %v3200, 4
    %v3202 = vadd.f32 %v3200, %v3201
    %v3203 = vrot.slane %v3202, 2
    %v3204 = vadd.f32 %v3202, %v3203
    %v3205 = vrot.slane %v3204, 1
    %v3206 = vadd.f32 %v3204, %v3205
    %v3207 = vadd.f32 %v3102, %v3105
    %v3208 = vrot.slane %v3207, 4
    %v3209 = vadd.f32 %v3207, %v3208
    %v3210 = vrot.slane %v3209, 2
    %v3211 = vadd.f32 %v3209, %v3210
    %v3212 = vrot.slane %v3211, 1
    %v3213 = vadd.f32 %v3211, %v3212
    %v3214 = vadd.f32 %v3108, %v3111
    %v3215 = vrot.slane %v3214, 4
    %v3216 = vadd.f32 %v3214, %v3215
    %v3217 = vrot.slane %v3216, 2
    %v3218 = vadd.f32 %v3216, %v3217
    %v3219 = vrot.slane %v3218, 1
    %v3220 = vadd.f32 %v3218, %v3219
    %v3221 = vadd.f32 %v3114, %v3117
    %v3222 = vrot.slane %v3221, 4
    %v3223 = vadd.f32 %v3221, %v3222
    %v3224 = vrot.slane %v3223, 2
    %v3225 = vadd.f32 %v3223, %v3224
    %v3226 = vrot.slane %v3225, 1
    %v3227 = vadd.f32 %v3225, %v3226
    %v3228 = vadd.f32 %v3120, %v3123
    %v3229 = vrot.slane %v3228, 4
    %v3230 = vadd.f32 %v3228, %v3229
    %v3231 = vrot.slane %v3230, 2
    %v3232 = vadd.f32 %v3230, %v3231
    %v3233 = vrot.slane %v3232, 1
    %v3234 = vadd.f32 %v3232, %v3233
    %v3235 = vadd.f32 %v3126, %v3129
    %v3236 = vrot.slane %v3235, 4
    %v3237 = vadd.f32 %v3235, %v3236
    %v3238 = vrot.slane %v3237, 2
    %v3239 = vadd.f32 %v3237, %v3238
    %v3240 = vrot.slane %v3239, 1
    %v3241 = vadd.f32 %v3239, %v3240
    %v3242 = vadd.f32 %v3132, %v3135
    %v3243 = vrot.slane %v3242, 4
    %v3244 = vadd.f32 %v3242, %v3243
    %v3245 = vrot.slane %v3244, 2
    %v3246 = vadd.f32 %v3244, %v3245
    %v3247 = vrot.slane %v3246, 1
    %v3248 = vadd.f32 %v3246, %v3247
    %v3249 = vld [vmem:[#allocation5 + $0x200] sm:$0x1]
    %v3250 = vperm.slane %v3249, 0
    %v3251 = vadd.f32 %v3143, %v3250
    %v3252 = vadd.f32 %v3150, %v3250
    %v3253 = vadd.f32 %v3157, %v3250
    %v3254 = vadd.f32 %v3164, %v3250
    %v3255 = vadd.f32 %v3171, %v3250
    %v3256 = vadd.f32 %v3178, %v3250
    %v3257 = vadd.f32 %v3185, %v3250
    %v3258 = vadd.f32 %v3192, %v3250
    %v3259 = vadd.f32 %v3199, %v3250
    %v3260 = vadd.f32 %v3206, %v3250
    %v3261 = vadd.f32 %v3213, %v3250
    %v3262 = vadd.f32 %v3220, %v3250
    %v3263 = vadd.f32 %v3227, %v3250
    %v3264 = vadd.f32 %v3234, %v3250
    %v3265 = vadd.f32 %v3241, %v3250
    %v3266 = vadd.f32 %v3248, %v3250
    %v3267 = vmax.f32 %v3251, 0.0
    %v3268 = vmax.f32 %v3252, 0.0
    %v3269 = vmax.f32 %v3253, 0.0
    %v3270 = vmax.f32 %v3254, 0.0
    %v3271 = vmax.f32 %v3255, 0.0
    %v3272 = vmax.f32 %v3256, 0.0
    %v3273 = vmax.f32 %v3257, 0.0
    %v3274 = vmax.f32 %v3258, 0.0
    %v3275 = vmax.f32 %v3259, 0.0
    %v3276 = vmax.f32 %v3260, 0.0
    %v3277 = vmax.f32 %v3261, 0.0
    %v3278 = vmax.f32 %v3262, 0.0
    %v3279 = vmax.f32 %v3263, 0.0
    %v3280 = vmax.f32 %v3264, 0.0
    %v3281 = vmax.f32 %v3265, 0.0
    %v3282 = vmax.f32 %v3266, 0.0
    %v3283 = vld [vmem:[#allocation5 + $0x208] sm:$0xff]
    %v3284 = vld [vmem:[#allocation5 + $0x210] sm:$0xff]
    %v3285 = vld [vmem:[#allocation5 + $0x218] sm:$0xff]
    %v3286 = vld [vmem:[#allocation5 + $0x220] sm:$0xff]
    %v3287 = vld [vmem:[#allocation5 + $0x228] sm:$0xff]
    %v3288 = vld [vmem:[#allocation5 + $0x230] sm:$0xff]
    %v3289 = vld [vmem:[#allocation5 + $0x238] sm:$0xff]
    %v3290 = vld [vmem:[#allocation5 + $0x240] sm:$0xff]
    %v3291 = vld [vmem:[#allocation5 + $0x248] sm:$0xff]
    %v3292 = vld [vmem:[#allocation5 + $0x250] sm:$0xff]
    %v3293 = vld [vmem:[#allocation5 + $0x258] sm:$0xff]
    %v3294 = vld [vmem:[#allocation5 + $0x260] sm:$0xff]
    %v3295 = vld [vmem:[#allocation5 + $0x268] sm:$0xff]
    %v3296 = vld [vmem:[#allocation5 + $0x270] sm:$0xff]
    %v3297 = vld [vmem:[#allocation5 + $0x278] sm:$0xff]
    %v3298 = vld [vmem:[#allocation5 + $0x280] sm:$0xff]
    %v3299 = vld [vmem:[#allocation5 + $0x288] sm:$0x1]
    %v3300 = vperm.slane %v3299, 0
    %v3317 = vrot.slane %v3268, 7
    %vm3318 = vcmask 1041409
    %v3319 = vsel %vm3318, %v3317, %v3267
    %v3320 = vrot.slane %v3269, 6
    %vm3321 = vcmask 1042434
    %v3322 = vsel %vm3321, %v3320, %v3319
    %v3323 = vrot.slane %v3270, 5
    %vm3324 = vcmask 1043459
    %v3325 = vsel %vm3324, %v3323, %v3322
    %v3326 = vrot.slane %v3271, 4
    %vm3327 = vcmask 1044484
    %v3328 = vsel %vm3327, %v3326, %v3325
    %v3329 = vrot.slane %v3272, 3
    %vm3330 = vcmask 1045509
    %v3331 = vsel %vm3330, %v3329, %v3328
    %v3332 = vrot.slane %v3273, 2
    %vm3333 = vcmask 1046534
    %v3334 = vsel %vm3333, %v3332, %v3331
    %v3335 = vrot.slane %v3274, 1
    %vm3336 = vcmask 1047559
    %v3337 = vsel %vm3336, %v3335, %v3334
    %v3338 = vrot.slane %v3276, 7
    %v3339 = vsel %vm3318, %v3338, %v3275
    %v3340 = vrot.slane %v3277, 6
    %v3341 = vsel %vm3321, %v3340, %v3339
    %v3342 = vrot.slane %v3278, 5
    %v3343 = vsel %vm3324, %v3342, %v3341
    %v3344 = vrot.slane %v3279, 4
    %v3345 = vsel %vm3327, %v3344, %v3343
    %v3346 = vrot.slane %v3280, 3
    %v3347 = vsel %vm3330, %v3346, %v3345
    %v3348 = vrot.slane %v3281, 2
    %v3349 = vsel %vm3333, %v3348, %v3347
    %v3350 = vrot.slane %v3282, 1
    %v3351 = vsel %vm3336, %v3350, %v3349
    %3354 = vmatpush.msra.mxu0 %v3298
    %3355 = vmatpush.msra.mxu0 %v3297
    %3356 = vmatpush.msra.mxu0 %v3296
    %3357 = vmatpush.msra.mxu0 %v3295
    %3358 = vmatpush.msra.mxu0 %v3294
    %3359 = vmatpush.msra.mxu0 %v3293
    %3360 = vmatpush.msra.mxu0 %v3292
    %3361 = vmatpush.msra.mxu0 %v3291
    %3362 = vmatpush.msra.mxu0 %v3290
    %3363 = vmatpush.msra.mxu0 %v3289
    %3364 = vmatpush.msra.mxu0 %v3288
    %3365 = vmatpush.msra.mxu0 %v3287
    %3366 = vmatpush.msra.mxu0 %v3286
    %3367 = vmatpush.msra.mxu0 %v3285
    %3368 = vmatpush.msra.mxu0 %v3284
    %3369 = vmatpush.msra.mxu0 %v3283
    %3370 = vmatmul.f32.gmra.mxu0 %v3337
    %v3371 = vpop.f32.mrf.mxu0
    %v3372 = vadd.f32 %v3300, %v3371
    %3373 = vmatmul.f32.gmra.mxu0 %v3351
    %v3374 = vpop.f32.mrf.mxu0
    %v3375 = vadd.f32 %v3300, %v3374
    %3376 = vdwg.mxu0
    %3377 = vst [vmem:[#allocation7] sm:$0xff] %v3372
    %3378 = vst [vmem:[#allocation7 + $0x8] sm:$0xff] %v3375
    // Predicated region
    $region22: #{tpu_custom_call.1} parent=1 // pred_check
      _
    $region23: #{tpu_custom_call.1} parent=1 // pred_check_branch
      %3380 = sbr.rel (0) target = $region25
    $region24: #{tpu_custom_call.1} parent=1 // pred_region
      %3382 = vsyncadd [#allocation4], 0
      %s3383 = sshll.u32 [#allocation7], 4
      %s3384 = int_to_ptr.vmem [resolvable:$true] %s3383
      %s3385 = sshll.u32 %s3, 4
      %s3386 = int_to_ptr.hbm [resolvable:$true] %s3385
      %3391 = dma.vmem_to_hbm [thread:$0]  %s3384, 256, %s3386, [#allocation4], 128, 128, 8
    $region25: #{tpu_custom_call.1} parent=1 // pred_fallthru
      _
    // Predicated region
    $region26: #{tpu_custom_call.1} parent=1 // pred_check
      _
    $region27: #{tpu_custom_call.1} parent=1 // pred_check_branch
      %3393 = sbr.rel (0) target = $region29
    $region28: #{tpu_custom_call.1} parent=1 // pred_region
      %3395 = dma.done [#allocation4], 256
    $region29: #{tpu_custom_call.1} parent=1 // pred_fallthru
      _
    %3396 = vsyncpa [#allocation3], 1
    %3397 = vsyncpa [#allocation6], 1
    %3398 = vsyncpa [#allocation4], 1

</llo_original>
